<compile_context>
chip_gen: v5e
topology: v5e:2x2
jax: 0.10.0
libtpu: 0.0.40
codegen_flags: <defaults>
</compile_context>

<pallas_src>
import functools

import jax
import jax.numpy as jnp
from jax import lax
from jax.experimental import pallas as pl
from jax.experimental.pallas import tpu as pltpu


NEG_SLOPE = 0.2   # nn.LeakyReLU(0.2) in the reference module
_LANE = 128       # packed parameter buffer lane width (multiple of the 128-lane tile)


# ------------------------------- fused kernel ----------------------------------

def _conv_generator_kernel(latent_ref, params_ref, comp_ref, prop_ref, *, layout):
    """Whole ConvGenerator forward on one TensorCore; everything resident in VMEM."""

    def get(name):
        r0, nr, nc = layout[name]             # static Python ints -> zero-cost slice
        return params_ref[r0:r0 + nr, 0:nc]

    def mm(a, b):
        return jnp.dot(a, b, preferred_element_type=jnp.float32)

    def leaky(x):
        return jnp.maximum(x, NEG_SLOPE * x)  # 2 VALU ops, no cmp/select mask

    def softmax_lanes(x):
        e = jnp.exp(x - jnp.max(x, axis=-1, keepdims=True))
        return e / jnp.sum(e, axis=-1, keepdims=True)      # exact normalization

    def conv(z, name, mid_identity=False):
        # Conv1d(k=3, s=1, p=1) (+ preceding nearest x2 upsample for stages 2-4).
        # Layout: channels on sublanes, positions on lanes, batch folded into rows
        # via block-diagonal weights.  The three taps are produced by ONE matmul
        # against the row-stacked weight; the precomputed A_k operators fold
        # upsample + shift + zero padding into a single right-multiply per tap.
        wv = get(name + "_wv")                # (3*B*Cout, B*Cin) row-stacked taps
        bcol = get(name + "_b")               # (B*Cout, 1)
        bco = layout[name + "_b"][1]
        p = mm(wv, z)                         # (3*B*Cout, L_in) -- all taps, 1 pass
        p0, p1, p2 = p[0:bco], p[bco:2 * bco], p[2 * bco:3 * bco]
        y = mm(p0, get(name + "_a0")) + mm(p2, get(name + "_a2"))
        y = y + (p1 if mid_identity else mm(p1, get(name + "_a1")))
        return y + bcol                       # (B*Cout, L_out)

    lat = latent_ref[...]                                         # (B, latent_dim)

    # ---------------- linear_block: Linear + LeakyReLU ----------------
    h = leaky(mm(lat, get("lin_w")) + get("lin_b"))               # (B, n_classes)

    # ---- .view(-1, 8, n_classes//8): rows -> (b*8 + ci), lanes -> position ----
    h_rep = mm(get("vrep"), h)                                    # (B*8, n_classes)
    x = mm(h_rep * get("vpick"), get("vgath"))                    # (B*8, L0)

    # ---------------- component_block ----------------
    x = leaky(conv(x, "c1", mid_identity=True))                   # (B*4nf, L0)
    x = leaky(conv(x, "c2"))                                      # (B*2nf, 2*L0)
    x = leaky(conv(x, "c3"))                                      # (B*nf,  4*L0)
    x = conv(x, "c4")                                             # (B*n_comp, n_classes)
    comp_ref[...] = softmax_lanes(x).astype(comp_ref.dtype)       # Softmax(dim=2)

    # ---------------- proportion_block ----------------
    q = leaky(mm(lat, get("p1_w")) + get("p1_b"))
    q = leaky(mm(q, get("p2_w")) + get("p2_b"))
    q = leaky(mm(q, get("p3_w")) + get("p3_b"))
    q = mm(q, get("p4_w")) + get("p4_b")                          # (B, n_components)
    prop_ref[...] = softmax_lanes(q).astype(prop_ref.dtype)       # Softmax(dim=1)


# --------------------------- parameter initialization ---------------------------

def _kaiming_normal(key, shape, fan_in):
    # torch.nn.init.kaiming_normal_ defaults: gain = sqrt(2), std = gain / sqrt(fan_in)
    std = (2.0 / fan_in) ** 0.5
    return std * jax.random.normal(key, shape, jnp.float32)


def _bias_uniform(key, shape, fan_in):
    bound = 1.0 / (fan_in ** 0.5)
    return jax.random.uniform(key, shape, jnp.float32, -bound, bound)


def init_params(key, latent_dim, n_components, n_classes, n_features):
    nf = n_features
    keys = jax.random.split(key, 32)
    ki = iter(range(32))
    p = {}
    # linear_block: Linear(latent_dim, n_classes) + LeakyReLU
    p["lin_w"] = _kaiming_normal(keys[next(ki)], (latent_dim, n_classes), latent_dim)
    p["lin_b"] = _bias_uniform(keys[next(ki)], (1, n_classes), latent_dim)
    # component_block convs; stored (k=3, Cin, Cout) so w[k, ci, co] = torch_w[co, ci, k]
    conv_dims = [(8, 4 * nf), (4 * nf, 2 * nf), (2 * nf, nf), (nf, n_components)]
    for idx, (cin, cout) in enumerate(conv_dims, start=1):
        fan_in = cin * 3
        p[f"c{idx}_w"] = _kaiming_normal(keys[next(ki)], (3, cin, cout), fan_in)
        p[f"c{idx}_b"] = _bias_uniform(keys[next(ki)], (1, cout), fan_in)
    # proportion_block linears; stored (Din, Dout)
    lin_dims = [(latent_dim, nf), (nf, 2 * nf), (2 * nf, 4 * nf), (4 * nf, n_components)]
    for idx, (din, dout) in enumerate(lin_dims, start=1):
        p[f"p{idx}_w"] = _kaiming_normal(keys[next(ki)], (din, dout), din)
        p[f"p{idx}_b"] = _bias_uniform(keys[next(ki)], (1, dout), din)
    return p


# ----------------------- one-time host-side parameter packing -------------------

def _s_prev(L):
    j = jnp.arange(L)[:, None]
    m = jnp.arange(L)[None, :]
    return (j == m - 1).astype(jnp.float32)        # (X@S)[:,m] = X[:,m-1]; col 0 = pad(0)


def _s_next(L):
    j = jnp.arange(L)[:, None]
    m = jnp.arange(L)[None, :]
    return (j == m + 1).astype(jnp.float32)        # (X@S)[:,m] = X[:,m+1]; col L-1 = pad(0)


def _upsample_op(L):
    j = jnp.arange(L)[:, None]
    m = jnp.arange(2 * L)[None, :]
    return ((m == 2 * j) | (m == 2 * j + 1)).astype(jnp.float32)   # nearest x2 on lanes


def _pack(entries):
    """Pack all params/constants into one (rows, 128k) f32 buffer (8-row aligned).

    Returns (buffer, {name: (row_offset, rows, cols)}); offsets are Python ints, so
    the kernel reads each entry through a static zero-cost ref slice.
    """
    width = max(int(a.shape[1]) for a in entries.values())
    width = -(-width // _LANE) * _LANE
    chunks, layout, off = [], {}, 0
    for name, a in entries.items():
        a = jnp.asarray(a, jnp.float32)
        r, c = int(a.shape[0]), int(a.shape[1])
        rp = -(-r // 8) * 8
        chunks.append(jnp.pad(a, ((0, rp - r), (0, width - c))))
        layout[name] = (off, r, c)
        off += rp
    return jnp.concatenate(chunks, axis=0), layout


def prepare_fused_params(params, batch, n_classes):
    """One-time repack of parameters + constant operators into the packed buffer."""
    L0 = n_classes // 8
    R = batch * 8
    e = {"lin_w": params["lin_w"], "lin_b": params["lin_b"]}

    # Constants realizing `.view(-1, 8, L0)` as replicate / pick-mask / gather matmuls.
    r = jnp.arange(R)[:, None]
    e["vrep"] = (r // 8 == jnp.arange(batch)[None, :]).astype(jnp.float32)      # (R, B)
    e["vpick"] = (jnp.arange(n_classes)[None, :] // L0 == r % 8).astype(jnp.float32)
    e["vgath"] = (jnp.arange(n_classes)[:, None] % L0
                  == jnp.arange(L0)[None, :]).astype(jnp.float32)               # (nc, L0)

    # Conv stages: row-stacked block-diagonal weights + fused upsample/shift operators.
    # TODO(synk): B**2 block-diagonal folding -- fold batch into the lane axis (or add
    # a batch grid axis) before batch grows into the tens on v7x (64 MiB VMEM).
    eye_b = jnp.eye(batch, dtype=jnp.float32)
    stages = [("c1", L0, False), ("c2", L0, True), ("c3", 2 * L0, True), ("c4", 4 * L0, True)]
    for name, l_in, has_up in stages:
        w = params[name + "_w"]                                    # (3, Cin, Cout)
        b = params[name + "_b"]                                    # (1, Cout)
        e[name + "_wv"] = jnp.concatenate(
            [jnp.kron(eye_b, w[k].T) for k in range(3)], axis=0)   # (3*B*Cout, B*Cin)
        e[name + "_b"] = jnp.tile(b.reshape(-1, 1), (batch, 1))    # (B*Cout, 1)
        if has_up:
            l_out = 2 * l_in
            u = _upsample_op(l_in)                                 # (l_in, l_out)
            e[name + "_a0"] = u @ _s_prev(l_out)
            e[name + "_a1"] = u
            e[name + "_a2"] = u @ _s_next(l_out)
        else:
            e[name + "_a0"] = _s_prev(l_in)
            e[name + "_a2"] = _s_next(l_in)

    for i in range(1, 5):
        e[f"p{i}_w"] = params[f"p{i}_w"]
        e[f"p{i}_b"] = params[f"p{i}_b"]
    return _pack(e)


# ------------------------------------ forward -----------------------------------

def conv_generator_forward(latent, packed, *, layout, n_components, n_classes):
    """Returns (proportions (B,1,n_components), components (B,n_components,n_classes))."""
    B = latent.shape[0]
    vmem = pl.BlockSpec(memory_space=pltpu.MemorySpace.VMEM)
    comp_flat, props = pl.pallas_call(
        functools.partial(_conv_generator_kernel, layout=layout),
        in_specs=[vmem, vmem],                 # 2 inputs total: latent + packed params
        out_specs=(vmem, vmem),
        out_shape=(
            jax.ShapeDtypeStruct((B * n_components, n_classes), jnp.float32),
            jax.ShapeDtypeStruct((B, n_components), jnp.float32),
        ),
        compiler_params=pltpu.CompilerParams(vmem_limit_bytes=32 * 1024 * 1024),
    )(latent, packed)
    components = comp_flat.reshape(B, n_components, n_classes)    # metadata-only reshape
    proportions = props.reshape(B, 1, n_components)               # metadata-only reshape
    return proportions, components


# ------------------------------ pure-JAX reference -------------------------------

def reference_forward(latent, params, n_components, n_classes):
    hp = lax.Precision.HIGHEST

    def leaky(x):
        return jnp.where(x > 0, x, NEG_SLOPE * x)

    def conv1d(x, w, b):   # x (B,Cin,L), w (3,Cin,Cout), b (1,Cout); cross-correlation
        L = x.shape[2]
        xp = jnp.pad(x, ((0, 0), (0, 0), (1, 1)))
        y = sum(jnp.einsum("bil,io->bol", xp[:, :, k:k + L], w[k], precision=hp)
                for k in range(3))
        return y + b.reshape(1, -1, 1)

    B = latent.shape[0]
    h = leaky(jnp.dot(latent, params["lin_w"], precision=hp) + params["lin_b"])
    x = h.reshape(B, 8, n_classes // 8)
    x = leaky(conv1d(x, params["c1_w"], params["c1_b"]))
    x = jnp.repeat(x, 2, axis=2)
    x = leaky(conv1d(x, params["c2_w"], params["c2_b"]))
    x = jnp.repeat(x, 2, axis=2)
    x = leaky(conv1d(x, params["c3_w"], params["c3_b"]))
    x = jnp.repeat(x, 2, axis=2)
    x = conv1d(x, params["c4_w"], params["c4_b"])
    components = jax.nn.softmax(x, axis=2)

    q = leaky(jnp.dot(latent, params["p1_w"], precision=hp) + params["p1_b"])
    q = leaky(jnp.dot(q, params["p2_w"], precision=hp) + params["p2_b"])
    q = leaky(jnp.dot(q, params["p3_w"], precision=hp) + params["p3_b"])
    q = jnp.dot(q, params["p4_w"], precision=hp) + params["p4_b"]
    proportions = jax.nn.softmax(q, axis=1).reshape(B, 1, n_components)
    return proportions, components


# --------------------------------------- main ------------------------------------

if __name__ == "__main__":
    B = 2
    latent_dim = 32
    n_components = 4
    n_classes = 64       # must be divisible by 8 (the .view(-1, 8, n_classes // 8))
    n_features = 16      # small n_features for a quick test

    key = jax.random.PRNGKey(0)
    pkey, xkey = jax.random.split(key)
    params = init_params(pkey, latent_dim, n_components, n_classes, n_features)
    latent = jax.random.normal(xkey, (B, latent_dim), jnp.float32)

    # One-time repack (off the hot path): single packed f32 buffer + static layout.
    packed, layout = prepare_fused_params(params, B, n_classes)

    fwd = jax.jit(functools.partial(
        conv_generator_forward, layout=layout,
        n_components=n_components, n_classes=n_classes))
    proportions, components = fwd(latent, packed)
    jax.block_until_ready((proportions, components))

    assert proportions.shape == (B, 1, n_components)
    assert components.shape == (B, n_components, n_classes)
    # Exact softmax normalization -> rows sum to 1 to f32 rounding.
    assert jnp.allclose(jnp.sum(proportions, axis=-1), 1.0, atol=1e-5)
    assert jnp.allclose(jnp.sum(components, axis=-1), 1.0, atol=1e-5)

    # Compare against the pure-JAX reference with a tolerance well below the signal
    # magnitude (components ~ 1/n_classes ~ 0.016), so layout/indexing bugs are caught.
    ref_props, ref_comps = reference_forward(latent, params, n_components, n_classes)
    assert jnp.allclose(proportions, ref_props, atol=5e-4, rtol=5e-3), float(
        jnp.max(jnp.abs(proportions - ref_props)))
    assert jnp.allclose(components, ref_comps, atol=5e-4, rtol=5e-3), float(
        jnp.max(jnp.abs(components - ref_comps)))

    print("KERNEL_OK")
</pallas_src>

<mosaic_0001>
module attributes {stable_mosaic.version = 11 : i64} {
  func.func @_conv_generator_kernel(%arg0: memref<2x32xf32, #tpu.memory_space<vmem>>, %arg1: memref<1424x128xf32, #tpu.memory_space<vmem>>, %arg2: memref<8x64xf32, #tpu.memory_space<vmem>>, %arg3: memref<2x4xf32, #tpu.memory_space<vmem>>) attributes {dimension_semantics = [], scalar_prefetch = 0 : i64, scratch_operands = 0 : i64, tpu.core_type = #tpu.core_type<tc>} {
    %c0 = arith.constant 0 : index
    %c0_0 = arith.constant 0 : index
    %0 = vector.load %arg0[%c0, %c0_0] : memref<2x32xf32, #tpu.memory_space<vmem>>, vector<2x32xf32>
    %c0_1 = arith.constant 0 : index
    %c0_2 = arith.constant 0 : index
    %1 = vector.load %arg1[%c0_1, %c0_2] : memref<1424x128xf32, #tpu.memory_space<vmem>>, vector<32x64xf32>
    %cst = arith.constant dense<0.000000e+00> : vector<2x64xf32>
    %2 = tpu.matmul %0, %1, %cst {dimension_numbers = #tpu.dot_dimension_numbers<[1], [0], [0], [1], [0, 0, 1, 1], [], []>} : vector<2x32xf32>, vector<32x64xf32>, vector<2x64xf32> -> vector<2x64xf32>
    %c32 = arith.constant 32 : index
    %c0_3 = arith.constant 0 : index
    %3 = vector.load %arg1[%c32, %c0_3] : memref<1424x128xf32, #tpu.memory_space<vmem>>, vector<1x64xf32>
    %4 = vector.broadcast %3 : vector<1x64xf32> to vector<2x64xf32>
    %5 = arith.addf %2, %4 : vector<2x64xf32>
    %cst_4 = arith.constant 2.000000e-01 : f32
    %6 = vector.broadcast %cst_4 : f32 to vector<2x64xf32>
    %7 = arith.mulf %6, %5 : vector<2x64xf32>
    %8 = arith.maximumf %5, %7 : vector<2x64xf32>
    %c40 = arith.constant 40 : index
    %c0_5 = arith.constant 0 : index
    %9 = vector.load %arg1[%c40, %c0_5] : memref<1424x128xf32, #tpu.memory_space<vmem>>, vector<16x2xf32>
    %cst_6 = arith.constant dense<0.000000e+00> : vector<16x64xf32>
    %10 = tpu.matmul %9, %8, %cst_6 {dimension_numbers = #tpu.dot_dimension_numbers<[1], [0], [0], [1], [0, 0, 1, 1], [], []>} : vector<16x2xf32>, vector<2x64xf32>, vector<16x64xf32> -> vector<16x64xf32>
    %c56 = arith.constant 56 : index
    %c0_7 = arith.constant 0 : index
    %11 = vector.load %arg1[%c56, %c0_7] : memref<1424x128xf32, #tpu.memory_space<vmem>>, vector<16x64xf32>
    %12 = arith.mulf %10, %11 : vector<16x64xf32>
    %c72 = arith.constant 72 : index
    %c0_8 = arith.constant 0 : index
    %13 = vector.load %arg1[%c72, %c0_8] : memref<1424x128xf32, #tpu.memory_space<vmem>>, vector<64x8xf32>
    %cst_9 = arith.constant dense<0.000000e+00> : vector<16x8xf32>
    %14 = tpu.matmul %12, %13, %cst_9 {dimension_numbers = #tpu.dot_dimension_numbers<[1], [0], [0], [1], [0, 0, 1, 1], [], []>} : vector<16x64xf32>, vector<64x8xf32>, vector<16x8xf32> -> vector<16x8xf32>
    %c136 = arith.constant 136 : index
    %c0_10 = arith.constant 0 : index
    %15 = vector.load %arg1[%c136, %c0_10] : memref<1424x128xf32, #tpu.memory_space<vmem>>, vector<384x16xf32>
    %c520 = arith.constant 520 : index
    %c0_11 = arith.constant 0 : index
    %16 = vector.load %arg1[%c520, %c0_11] : memref<1424x128xf32, #tpu.memory_space<vmem>>, vector<128x1xf32>
    %cst_12 = arith.constant dense<0.000000e+00> : vector<384x8xf32>
    %17 = tpu.matmul %15, %14, %cst_12 {dimension_numbers = #tpu.dot_dimension_numbers<[1], [0], [0], [1], [0, 0, 1, 1], [], []>} : vector<384x16xf32>, vector<16x8xf32>, vector<384x8xf32> -> vector<384x8xf32>
    %18 = vector.extract_strided_slice %17 {offsets = [0, 0], sizes = [128, 8], strides = [1, 1]} : vector<384x8xf32> to vector<128x8xf32>
    %19 = vector.extract_strided_slice %17 {offsets = [128, 0], sizes = [128, 8], strides = [1, 1]} : vector<384x8xf32> to vector<128x8xf32>
    %20 = vector.extract_strided_slice %17 {offsets = [256, 0], sizes = [128, 8], strides = [1, 1]} : vector<384x8xf32> to vector<128x8xf32>
    %c648 = arith.constant 648 : index
    %c0_13 = arith.constant 0 : index
    %21 = vector.load %arg1[%c648, %c0_13] : memref<1424x128xf32, #tpu.memory_space<vmem>>, vector<8x8xf32>
    %cst_14 = arith.constant dense<0.000000e+00> : vector<128x8xf32>
    %22 = tpu.matmul %18, %21, %cst_14 {dimension_numbers = #tpu.dot_dimension_numbers<[1], [0], [0], [1], [0, 0, 1, 1], [], []>} : vector<128x8xf32>, vector<8x8xf32>, vector<128x8xf32> -> vector<128x8xf32>
    %c656 = arith.constant 656 : index
    %c0_15 = arith.constant 0 : index
    %23 = vector.load %arg1[%c656, %c0_15] : memref<1424x128xf32, #tpu.memory_space<vmem>>, vector<8x8xf32>
    %cst_16 = arith.constant dense<0.000000e+00> : vector<128x8xf32>
    %24 = tpu.matmul %20, %23, %cst_16 {dimension_numbers = #tpu.dot_dimension_numbers<[1], [0], [0], [1], [0, 0, 1, 1], [], []>} : vector<128x8xf32>, vector<8x8xf32>, vector<128x8xf32> -> vector<128x8xf32>
    %25 = arith.addf %22, %24 : vector<128x8xf32>
    %26 = arith.addf %25, %19 : vector<128x8xf32>
    %27 = vector.broadcast %16 : vector<128x1xf32> to vector<128x8xf32>
    %28 = arith.addf %26, %27 : vector<128x8xf32>
    %cst_17 = arith.constant 2.000000e-01 : f32
    %29 = vector.broadcast %cst_17 : f32 to vector<128x8xf32>
    %30 = arith.mulf %29, %28 : vector<128x8xf32>
    %31 = arith.maximumf %28, %30 : vector<128x8xf32>
    %c664 = arith.constant 664 : index
    %c0_18 = arith.constant 0 : index
    %32 = vector.load %arg1[%c664, %c0_18] : memref<1424x128xf32, #tpu.memory_space<vmem>>, vector<192x128xf32>
    %c856 = arith.constant 856 : index
    %c0_19 = arith.constant 0 : index
    %33 = vector.load %arg1[%c856, %c0_19] : memref<1424x128xf32, #tpu.memory_space<vmem>>, vector<64x1xf32>
    %cst_20 = arith.constant dense<0.000000e+00> : vector<192x8xf32>
    %34 = tpu.matmul %32, %31, %cst_20 {dimension_numbers = #tpu.dot_dimension_numbers<[1], [0], [0], [1], [0, 0, 1, 1], [], []>} : vector<192x128xf32>, vector<128x8xf32>, vector<192x8xf32> -> vector<192x8xf32>
    %35 = vector.extract_strided_slice %34 {offsets = [0, 0], sizes = [64, 8], strides = [1, 1]} : vector<192x8xf32> to vector<64x8xf32>
    %36 = vector.extract_strided_slice %34 {offsets = [64, 0], sizes = [64, 8], strides = [1, 1]} : vector<192x8xf32> to vector<64x8xf32>
    %37 = vector.extract_strided_slice %34 {offsets = [128, 0], sizes = [64, 8], strides = [1, 1]} : vector<192x8xf32> to vector<64x8xf32>
    %c920 = arith.constant 920 : index
    %c0_21 = arith.constant 0 : index
    %38 = vector.load %arg1[%c920, %c0_21] : memref<1424x128xf32, #tpu.memory_space<vmem>>, vector<8x16xf32>
    %cst_22 = arith.constant dense<0.000000e+00> : vector<64x16xf32>
    %39 = tpu.matmul %35, %38, %cst_22 {dimension_numbers = #tpu.dot_dimension_numbers<[1], [0], [0], [1], [0, 0, 1, 1], [], []>} : vector<64x8xf32>, vector<8x16xf32>, vector<64x16xf32> -> vector<64x16xf32>
    %c936 = arith.constant 936 : index
    %c0_23 = arith.constant 0 : index
    %40 = vector.load %arg1[%c936, %c0_23] : memref<1424x128xf32, #tpu.memory_space<vmem>>, vector<8x16xf32>
    %cst_24 = arith.constant dense<0.000000e+00> : vector<64x16xf32>
    %41 = tpu.matmul %37, %40, %cst_24 {dimension_numbers = #tpu.dot_dimension_numbers<[1], [0], [0], [1], [0, 0, 1, 1], [], []>} : vector<64x8xf32>, vector<8x16xf32>, vector<64x16xf32> -> vector<64x16xf32>
    %42 = arith.addf %39, %41 : vector<64x16xf32>
    %c928 = arith.constant 928 : index
    %c0_25 = arith.constant 0 : index
    %43 = vector.load %arg1[%c928, %c0_25] : memref<1424x128xf32, #tpu.memory_space<vmem>>, vector<8x16xf32>
    %cst_26 = arith.constant dense<0.000000e+00> : vector<64x16xf32>
    %44 = tpu.matmul %36, %43, %cst_26 {dimension_numbers = #tpu.dot_dimension_numbers<[1], [0], [0], [1], [0, 0, 1, 1], [], []>} : vector<64x8xf32>, vector<8x16xf32>, vector<64x16xf32> -> vector<64x16xf32>
    %45 = arith.addf %42, %44 : vector<64x16xf32>
    %46 = vector.broadcast %33 : vector<64x1xf32> to vector<64x16xf32>
    %47 = arith.addf %45, %46 : vector<64x16xf32>
    %cst_27 = arith.constant 2.000000e-01 : f32
    %48 = vector.broadcast %cst_27 : f32 to vector<64x16xf32>
    %49 = arith.mulf %48, %47 : vector<64x16xf32>
    %50 = arith.maximumf %47, %49 : vector<64x16xf32>
    %c944 = arith.constant 944 : index
    %c0_28 = arith.constant 0 : index
    %51 = vector.load %arg1[%c944, %c0_28] : memref<1424x128xf32, #tpu.memory_space<vmem>>, vector<96x64xf32>
    %c1040 = arith.constant 1040 : index
    %c0_29 = arith.constant 0 : index
    %52 = vector.load %arg1[%c1040, %c0_29] : memref<1424x128xf32, #tpu.memory_space<vmem>>, vector<32x1xf32>
    %cst_30 = arith.constant dense<0.000000e+00> : vector<96x16xf32>
    %53 = tpu.matmul %51, %50, %cst_30 {dimension_numbers = #tpu.dot_dimension_numbers<[1], [0], [0], [1], [0, 0, 1, 1], [], []>} : vector<96x64xf32>, vector<64x16xf32>, vector<96x16xf32> -> vector<96x16xf32>
    %54 = vector.extract_strided_slice %53 {offsets = [0, 0], sizes = [32, 16], strides = [1, 1]} : vector<96x16xf32> to vector<32x16xf32>
    %55 = vector.extract_strided_slice %53 {offsets = [32, 0], sizes = [32, 16], strides = [1, 1]} : vector<96x16xf32> to vector<32x16xf32>
    %56 = vector.extract_strided_slice %53 {offsets = [64, 0], sizes = [32, 16], strides = [1, 1]} : vector<96x16xf32> to vector<32x16xf32>
    %c1072 = arith.constant 1072 : index
    %c0_31 = arith.constant 0 : index
    %57 = vector.load %arg1[%c1072, %c0_31] : memref<1424x128xf32, #tpu.memory_space<vmem>>, vector<16x32xf32>
    %cst_32 = arith.constant dense<0.000000e+00> : vector<32x32xf32>
    %58 = tpu.matmul %54, %57, %cst_32 {dimension_numbers = #tpu.dot_dimension_numbers<[1], [0], [0], [1], [0, 0, 1, 1], [], []>} : vector<32x16xf32>, vector<16x32xf32>, vector<32x32xf32> -> vector<32x32xf32>
    %c1104 = arith.constant 1104 : index
    %c0_33 = arith.constant 0 : index
    %59 = vector.load %arg1[%c1104, %c0_33] : memref<1424x128xf32, #tpu.memory_space<vmem>>, vector<16x32xf32>
    %cst_34 = arith.constant dense<0.000000e+00> : vector<32x32xf32>
    %60 = tpu.matmul %56, %59, %cst_34 {dimension_numbers = #tpu.dot_dimension_numbers<[1], [0], [0], [1], [0, 0, 1, 1], [], []>} : vector<32x16xf32>, vector<16x32xf32>, vector<32x32xf32> -> vector<32x32xf32>
    %61 = arith.addf %58, %60 : vector<32x32xf32>
    %c1088 = arith.constant 1088 : index
    %c0_35 = arith.constant 0 : index
    %62 = vector.load %arg1[%c1088, %c0_35] : memref<1424x128xf32, #tpu.memory_space<vmem>>, vector<16x32xf32>
    %cst_36 = arith.constant dense<0.000000e+00> : vector<32x32xf32>
    %63 = tpu.matmul %55, %62, %cst_36 {dimension_numbers = #tpu.dot_dimension_numbers<[1], [0], [0], [1], [0, 0, 1, 1], [], []>} : vector<32x16xf32>, vector<16x32xf32>, vector<32x32xf32> -> vector<32x32xf32>
    %64 = arith.addf %61, %63 : vector<32x32xf32>
    %65 = vector.broadcast %52 : vector<32x1xf32> to vector<32x32xf32>
    %66 = arith.addf %64, %65 : vector<32x32xf32>
    %cst_37 = arith.constant 2.000000e-01 : f32
    %67 = vector.broadcast %cst_37 : f32 to vector<32x32xf32>
    %68 = arith.mulf %67, %66 : vector<32x32xf32>
    %69 = arith.maximumf %66, %68 : vector<32x32xf32>
    %c1120 = arith.constant 1120 : index
    %c0_38 = arith.constant 0 : index
    %70 = vector.load %arg1[%c1120, %c0_38] : memref<1424x128xf32, #tpu.memory_space<vmem>>, vector<24x32xf32>
    %c1144 = arith.constant 1144 : index
    %c0_39 = arith.constant 0 : index
    %71 = vector.load %arg1[%c1144, %c0_39] : memref<1424x128xf32, #tpu.memory_space<vmem>>, vector<8x1xf32>
    %cst_40 = arith.constant dense<0.000000e+00> : vector<24x32xf32>
    %72 = tpu.matmul %70, %69, %cst_40 {dimension_numbers = #tpu.dot_dimension_numbers<[1], [0], [0], [1], [0, 0, 1, 1], [], []>} : vector<24x32xf32>, vector<32x32xf32>, vector<24x32xf32> -> vector<24x32xf32>
    %73 = vector.extract_strided_slice %72 {offsets = [0, 0], sizes = [8, 32], strides = [1, 1]} : vector<24x32xf32> to vector<8x32xf32>
    %74 = vector.extract_strided_slice %72 {offsets = [8, 0], sizes = [8, 32], strides = [1, 1]} : vector<24x32xf32> to vector<8x32xf32>
    %75 = vector.extract_strided_slice %72 {offsets = [16, 0], sizes = [8, 32], strides = [1, 1]} : vector<24x32xf32> to vector<8x32xf32>
    %c1152 = arith.constant 1152 : index
    %c0_41 = arith.constant 0 : index
    %76 = vector.load %arg1[%c1152, %c0_41] : memref<1424x128xf32, #tpu.memory_space<vmem>>, vector<32x64xf32>
    %cst_42 = arith.constant dense<0.000000e+00> : vector<8x64xf32>
    %77 = tpu.matmul %73, %76, %cst_42 {dimension_numbers = #tpu.dot_dimension_numbers<[1], [0], [0], [1], [0, 0, 1, 1], [], []>} : vector<8x32xf32>, vector<32x64xf32>, vector<8x64xf32> -> vector<8x64xf32>
    %c1216 = arith.constant 1216 : index
    %c0_43 = arith.constant 0 : index
    %78 = vector.load %arg1[%c1216, %c0_43] : memref<1424x128xf32, #tpu.memory_space<vmem>>, vector<32x64xf32>
    %cst_44 = arith.constant dense<0.000000e+00> : vector<8x64xf32>
    %79 = tpu.matmul %75, %78, %cst_44 {dimension_numbers = #tpu.dot_dimension_numbers<[1], [0], [0], [1], [0, 0, 1, 1], [], []>} : vector<8x32xf32>, vector<32x64xf32>, vector<8x64xf32> -> vector<8x64xf32>
    %80 = arith.addf %77, %79 : vector<8x64xf32>
    %c1184 = arith.constant 1184 : index
    %c0_45 = arith.constant 0 : index
    %81 = vector.load %arg1[%c1184, %c0_45] : memref<1424x128xf32, #tpu.memory_space<vmem>>, vector<32x64xf32>
    %cst_46 = arith.constant dense<0.000000e+00> : vector<8x64xf32>
    %82 = tpu.matmul %74, %81, %cst_46 {dimension_numbers = #tpu.dot_dimension_numbers<[1], [0], [0], [1], [0, 0, 1, 1], [], []>} : vector<8x32xf32>, vector<32x64xf32>, vector<8x64xf32> -> vector<8x64xf32>
    %83 = arith.addf %80, %82 : vector<8x64xf32>
    %84 = vector.broadcast %71 : vector<8x1xf32> to vector<8x64xf32>
    %85 = arith.addf %83, %84 : vector<8x64xf32>
    %cst_47 = arith.constant dense<0xFF800000> : vector<8xf32>
    %86 = vector.multi_reduction <maximumf>, %85, %cst_47 [1] : vector<8x64xf32> to vector<8xf32>
    %87 = vector.shape_cast %86 : vector<8xf32> to vector<8x1xf32>
    %88 = vector.broadcast %87 : vector<8x1xf32> to vector<8x64xf32>
    %89 = arith.subf %85, %88 : vector<8x64xf32>
    %90 = math.exp %89 : vector<8x64xf32>
    %cst_48 = arith.constant dense<0.000000e+00> : vector<8xf32>
    %91 = vector.multi_reduction <add>, %90, %cst_48 [1] : vector<8x64xf32> to vector<8xf32>
    %92 = vector.shape_cast %91 : vector<8xf32> to vector<8x1xf32>
    %93 = vector.broadcast %92 : vector<8x1xf32> to vector<8x64xf32>
    %94 = arith.divf %90, %93 : vector<8x64xf32>
    %c0_49 = arith.constant 0 : index
    %c0_50 = arith.constant 0 : index
    %95 = vector.load %arg2[%c0_49, %c0_50] : memref<8x64xf32, #tpu.memory_space<vmem>>, vector<8x64xf32>
    tpu.vector_store %arg2[%c0_49, %c0_50], %94 {strides = array<i32>} : memref<8x64xf32, #tpu.memory_space<vmem>>, vector<8x64xf32>,
    %c1248 = arith.constant 1248 : index
    %c0_51 = arith.constant 0 : index
    %96 = vector.load %arg1[%c1248, %c0_51] : memref<1424x128xf32, #tpu.memory_space<vmem>>, vector<32x16xf32>
    %cst_52 = arith.constant dense<0.000000e+00> : vector<2x16xf32>
    %97 = tpu.matmul %0, %96, %cst_52 {dimension_numbers = #tpu.dot_dimension_numbers<[1], [0], [0], [1], [0, 0, 1, 1], [], []>} : vector<2x32xf32>, vector<32x16xf32>, vector<2x16xf32> -> vector<2x16xf32>
    %c1280 = arith.constant 1280 : index
    %c0_53 = arith.constant 0 : index
    %98 = vector.load %arg1[%c1280, %c0_53] : memref<1424x128xf32, #tpu.memory_space<vmem>>, vector<1x16xf32>
    %99 = vector.broadcast %98 : vector<1x16xf32> to vector<2x16xf32>
    %100 = arith.addf %97, %99 : vector<2x16xf32>
    %cst_54 = arith.constant 2.000000e-01 : f32
    %101 = vector.broadcast %cst_54 : f32 to vector<2x16xf32>
    %102 = arith.mulf %101, %100 : vector<2x16xf32>
    %103 = arith.maximumf %100, %102 : vector<2x16xf32>
    %c1288 = arith.constant 1288 : index
    %c0_55 = arith.constant 0 : index
    %104 = vector.load %arg1[%c1288, %c0_55] : memref<1424x128xf32, #tpu.memory_space<vmem>>, vector<16x32xf32>
    %cst_56 = arith.constant dense<0.000000e+00> : vector<2x32xf32>
    %105 = tpu.matmul %103, %104, %cst_56 {dimension_numbers = #tpu.dot_dimension_numbers<[1], [0], [0], [1], [0, 0, 1, 1], [], []>} : vector<2x16xf32>, vector<16x32xf32>, vector<2x32xf32> -> vector<2x32xf32>
    %c1304 = arith.constant 1304 : index
    %c0_57 = arith.constant 0 : index
    %106 = vector.load %arg1[%c1304, %c0_57] : memref<1424x128xf32, #tpu.memory_space<vmem>>, vector<1x32xf32>
    %107 = vector.broadcast %106 : vector<1x32xf32> to vector<2x32xf32>
    %108 = arith.addf %105, %107 : vector<2x32xf32>
    %cst_58 = arith.constant 2.000000e-01 : f32
    %109 = vector.broadcast %cst_58 : f32 to vector<2x32xf32>
    %110 = arith.mulf %109, %108 : vector<2x32xf32>
    %111 = arith.maximumf %108, %110 : vector<2x32xf32>
    %c1312 = arith.constant 1312 : index
    %c0_59 = arith.constant 0 : index
    %112 = vector.load %arg1[%c1312, %c0_59] : memref<1424x128xf32, #tpu.memory_space<vmem>>, vector<32x64xf32>
    %cst_60 = arith.constant dense<0.000000e+00> : vector<2x64xf32>
    %113 = tpu.matmul %111, %112, %cst_60 {dimension_numbers = #tpu.dot_dimension_numbers<[1], [0], [0], [1], [0, 0, 1, 1], [], []>} : vector<2x32xf32>, vector<32x64xf32>, vector<2x64xf32> -> vector<2x64xf32>
    %c1344 = arith.constant 1344 : index
    %c0_61 = arith.constant 0 : index
    %114 = vector.load %arg1[%c1344, %c0_61] : memref<1424x128xf32, #tpu.memory_space<vmem>>, vector<1x64xf32>
    %115 = vector.broadcast %114 : vector<1x64xf32> to vector<2x64xf32>
    %116 = arith.addf %113, %115 : vector<2x64xf32>
    %cst_62 = arith.constant 2.000000e-01 : f32
    %117 = vector.broadcast %cst_62 : f32 to vector<2x64xf32>
    %118 = arith.mulf %117, %116 : vector<2x64xf32>
    %119 = arith.maximumf %116, %118 : vector<2x64xf32>
    %c1352 = arith.constant 1352 : index
    %c0_63 = arith.constant 0 : index
    %120 = vector.load %arg1[%c1352, %c0_63] : memref<1424x128xf32, #tpu.memory_space<vmem>>, vector<64x4xf32>
    %cst_64 = arith.constant dense<0.000000e+00> : vector<2x4xf32>
    %121 = tpu.matmul %119, %120, %cst_64 {dimension_numbers = #tpu.dot_dimension_numbers<[1], [0], [0], [1], [0, 0, 1, 1], [], []>} : vector<2x64xf32>, vector<64x4xf32>, vector<2x4xf32> -> vector<2x4xf32>
    %c1416 = arith.constant 1416 : index
    %c0_65 = arith.constant 0 : index
    %122 = vector.load %arg1[%c1416, %c0_65] : memref<1424x128xf32, #tpu.memory_space<vmem>>, vector<1x4xf32>
    %123 = vector.broadcast %122 : vector<1x4xf32> to vector<2x4xf32>
    %124 = arith.addf %121, %123 : vector<2x4xf32>
    %cst_66 = arith.constant dense<0xFF800000> : vector<2xf32>
    %125 = vector.multi_reduction <maximumf>, %124, %cst_66 [1] : vector<2x4xf32> to vector<2xf32>
    %126 = vector.shape_cast %125 : vector<2xf32> to vector<2x1xf32>
    %127 = vector.broadcast %126 : vector<2x1xf32> to vector<2x4xf32>
    %128 = arith.subf %124, %127 : vector<2x4xf32>
    %129 = math.exp %128 : vector<2x4xf32>
    %cst_67 = arith.constant dense<0.000000e+00> : vector<2xf32>
    %130 = vector.multi_reduction <add>, %129, %cst_67 [1] : vector<2x4xf32> to vector<2xf32>
    %131 = vector.shape_cast %130 : vector<2xf32> to vector<2x1xf32>
    %132 = vector.broadcast %131 : vector<2x1xf32> to vector<2x4xf32>
    %133 = arith.divf %129, %132 : vector<2x4xf32>
    %c0_68 = arith.constant 0 : index
    %c0_69 = arith.constant 0 : index
    %134 = vector.load %arg3[%c0_68, %c0_69] : memref<2x4xf32, #tpu.memory_space<vmem>>, vector<2x4xf32>
    tpu.vector_store %arg3[%c0_68, %c0_69], %133 {strides = array<i32>} : memref<2x4xf32, #tpu.memory_space<vmem>>, vector<2x4xf32>,
    return
  }
}

</mosaic_0001>

<llo_original>
// kernel: conv_generator_forward.1
$region0: #{conv_generator_forward.1}
  #allocation0 [shape = 'u32[]', space=smem, size = 0x4, offset = 0x4, fixed_abs, tag = 'smem constant byte address 0x4 - core index']
  #allocation1 [shape = 'u32[72,128]{1,0:T(1,128)}', space=vmem, size = 0x9000, scoped, tag = 'internal scratch']
  %s0 = inlined_call_operand.hbm [shape: f32[2,32], index: 0, kind: input, shape index: {}]
  %s1 = inlined_call_operand.hbm [shape: f32[1424,128], index: 1, kind: input, shape index: {}]
  %s2 = inlined_call_operand.hbm [shape: f32[8,64], index: 2, kind: output, shape index: {0}]
  %s3 = inlined_call_operand.hbm [shape: f32[2,4], index: 3, kind: output, shape index: {1}]
  %4 = xla_tuple %s2, %s3
  %s5 = sld [smem:[#allocation0]]
  $region34: #{conv_generator_forward.1} parent=0
    _
  %s7 = ssub.s32 1, %s5
  %s8 = scalar_select 0, %s7, %s5
  $region1: #{conv_generator_forward.1} parent=0
    #allocation2 [shape = 'u8[1024]{0}', space=vmem, size = 0x400, scoped, tag = 'input window, operand 0, single buffered']
    #allocation3 [shape = 's32[1]{0}', space=sflag, size = 0x4, scoped, tag = 'scoped memory for conv_generator_forward.1']
    #allocation4 [shape = 's32[1]{0}', space=sflag, size = 0x4, scoped, tag = 'scoped memory for conv_generator_forward.1']
    #allocation5 [shape = 'u8[729088]{0}', space=vmem, size = 0xb2000, scoped, tag = 'input window, operand 1, single buffered']
    #allocation6 [shape = 's32[1]{0}', space=sflag, size = 0x4, scoped, tag = 'scoped memory for conv_generator_forward.1']
    #allocation7 [shape = 'u8[4096]{0}', space=vmem, size = 0x1000, scoped, tag = 'output window, operand 0, single buffered']
    #allocation8 [shape = 'u8[1024]{0}', space=vmem, size = 0x400, scoped, tag = 'output window, operand 1, single buffered']
    #allocation9 [shape = 's32[1]{0}', space=sflag, size = 0x4, scoped, tag = 'scoped memory for conv_generator_forward.1']
    %9 = vsyncpa [#allocation3], 0
    %10 = vsyncpa [#allocation6], 0
    %11 = vsyncpa [#allocation4], 0
    %12 = vsyncpa [#allocation9], 0
    // Predicated region
    $region2: #{conv_generator_forward.1} parent=1 // pred_check
      _
    $region3: #{conv_generator_forward.1} parent=1 // pred_check_branch
      %14 = sbr.rel (0) target = $region5
    $region4: #{conv_generator_forward.1} parent=1 // pred_region
      %16 = vsyncadd [#allocation3], 0
      %s18 = sshll.u32 %s0, 4
      %s19 = int_to_ptr.hbm [resolvable:$true] %s18
      %s20 = sshll.u32 [#allocation2], 4
      %s21 = int_to_ptr.vmem [resolvable:$true] %s20
      %23 = dma.hbm_to_vmem [thread:$0]  %s19, 32, %s21, [#allocation3]
    $region5: #{conv_generator_forward.1} parent=1 // pred_fallthru
      _
    // Predicated region
    $region6: #{conv_generator_forward.1} parent=1 // pred_check
      _
    $region7: #{conv_generator_forward.1} parent=1 // pred_check_branch
      %25 = sbr.rel (0) target = $region9
    $region8: #{conv_generator_forward.1} parent=1 // pred_region
      %27 = vsyncadd [#allocation6], 0
      %s28 = sshll.u32 %s1, 4
      %s29 = int_to_ptr.hbm [resolvable:$true] %s28
      %s30 = sshll.u32 [#allocation5], 4
      %s31 = int_to_ptr.vmem [resolvable:$true] %s30
      %36 = dma.hbm_to_vmem [thread:$0]  %s29, 22784, %s31, [#allocation6], 128, 128, 8
    $region9: #{conv_generator_forward.1} parent=1 // pred_fallthru
      _
    // Predicated region
    $region10: #{conv_generator_forward.1} parent=1 // pred_check
      _
    $region11: #{conv_generator_forward.1} parent=1 // pred_check_branch
      %38 = sbr.rel (0) target = $region13
    $region12: #{conv_generator_forward.1} parent=1 // pred_region
      %40 = dma.done [#allocation3], 32
    $region13: #{conv_generator_forward.1} parent=1 // pred_fallthru
      _
    // Predicated region
    $region14: #{conv_generator_forward.1} parent=1 // pred_check
      _
    $region15: #{conv_generator_forward.1} parent=1 // pred_check_branch
      %42 = sbr.rel (0) target = $region17
    $region16: #{conv_generator_forward.1} parent=1 // pred_region
      %44 = dma.done [#allocation6], 22784
    $region17: #{conv_generator_forward.1} parent=1 // pred_fallthru
      _
    %v45 = vld [vmem:[#allocation2] sm:$0x3]
    %v46 = vld [vmem:[#allocation5] sm:$0xff]
    %v47 = vld [vmem:[#allocation5 + $0x8] sm:$0xff]
    %v48 = vld [vmem:[#allocation5 + $0x10] sm:$0xff]
    %v49 = vld [vmem:[#allocation5 + $0x18] sm:$0xff]
    %v50 = vld [vmem:[#allocation5 + $0x20] sm:$0x1]
    %v51 = vperm.slane %v50, 0
    %vm52 = vcmask 261120
    %v54 = vsel %vm52, %v45, 0
    %56 = vmatpush.msra.mxu0 0.0
    %57 = vmatpush.msra.mxu0 0.0
    %58 = vmatpush.msra.mxu0 0.0
    %59 = vmatpush.msra.mxu0 0.0
    %60 = vmatpush.msra.mxu0 0.0
    %61 = vmatpush.msra.mxu0 0.0
    %62 = vmatpush.msra.mxu0 0.0
    %63 = vmatpush.msra.mxu0 0.0
    %64 = vmatpush.msra.mxu0 0.0
    %65 = vmatpush.msra.mxu0 0.0
    %66 = vmatpush.msra.mxu0 0.0
    %67 = vmatpush.msra.mxu0 0.0
    %68 = vmatpush.msra.mxu0 %v49
    %69 = vmatpush.msra.mxu0 %v48
    %70 = vmatpush.msra.mxu0 %v47
    %71 = vmatpush.msra.mxu0 %v46
    %72 = vmatmul.f32.gmra.mxu0 %v54
    %v73 = vpop.f32.mrf.mxu0
    %v74 = vadd.f32 %v51, %v73
    %75 = vdwg.mxu0
    %v76 = vmul.f32 %v74, 0.2
    %v77 = vmax.f32 %v74, %v76
    %v78 = vld [vmem:[#allocation5 + $0x28] sm:$0xff]
    %v79 = vld [vmem:[#allocation5 + $0x30] sm:$0xff]
    %vm80 = vcmask 15360
    %v82 = vsel %vm80, %v78, 0
    %v85 = vsel %vm80, %v79, 0
    %vm87 = vcmask 1041408
    %v89 = vsel %vm87, %v77, 0
    %91 = vmatpush.msra.mxu0 0.0
    %92 = vmatpush.msra.mxu0 0.0
    %93 = vmatpush.msra.mxu0 0.0
    %94 = vmatpush.msra.mxu0 0.0
    %95 = vmatpush.msra.mxu0 0.0
    %96 = vmatpush.msra.mxu0 0.0
    %97 = vmatpush.msra.mxu0 0.0
    %98 = vmatpush.msra.mxu0 0.0
    %99 = vmatpush.msra.mxu0 0.0
    %100 = vmatpush.msra.mxu0 0.0
    %101 = vmatpush.msra.mxu0 0.0
    %102 = vmatpush.msra.mxu0 0.0
    %103 = vmatpush.msra.mxu0 0.0
    %104 = vmatpush.msra.mxu0 0.0
    %105 = vmatpush.msra.mxu0 0.0
    %106 = vmatpush.msra.mxu0 %v89
    %107 = vmatmul.f32.gmra.mxu0 %v82
    %v108 = vpop.f32.mrf.mxu0
    %v109 = vadd.f32 0.0, %v108
    %110 = vmatmul.f32.gmra.mxu0 %v85
    %v111 = vpop.f32.mrf.mxu0
    %v112 = vadd.f32 0.0, %v111
    %113 = vdwg.mxu0
    %v114 = vld [vmem:[#allocation5 + $0x38] sm:$0xff]
    %v115 = vld [vmem:[#allocation5 + $0x40] sm:$0xff]
    %v116 = vmul.f32 %v109, %v114
    %v117 = vmul.f32 %v112, %v115
    %v118 = vld [vmem:[#allocation5 + $0x48] sm:$0xff]
    %v119 = vld [vmem:[#allocation5 + $0x50] sm:$0xff]
    %v120 = vld [vmem:[#allocation5 + $0x58] sm:$0xff]
    %v121 = vld [vmem:[#allocation5 + $0x60] sm:$0xff]
    %v122 = vld [vmem:[#allocation5 + $0x68] sm:$0xff]
    %v123 = vld [vmem:[#allocation5 + $0x70] sm:$0xff]
    %v124 = vld [vmem:[#allocation5 + $0x78] sm:$0xff]
    %v125 = vld [vmem:[#allocation5 + $0x80] sm:$0xff]
    %vm126 = vcmask 523264
    %v128 = vsel %vm126, %v116, 0
    %v131 = vsel %vm126, %v117, 0
    %133 = vmatpush.msra.mxu0 0.0
    %134 = vmatpush.msra.mxu0 0.0
    %135 = vmatpush.msra.mxu0 0.0
    %136 = vmatpush.msra.mxu0 0.0
    %137 = vmatpush.msra.mxu0 0.0
    %138 = vmatpush.msra.mxu0 0.0
    %139 = vmatpush.msra.mxu0 0.0
    %140 = vmatpush.msra.mxu0 0.0
    %141 = vmatpush.msra.mxu0 %v125
    %142 = vmatpush.msra.mxu0 %v124
    %143 = vmatpush.msra.mxu0 %v123
    %144 = vmatpush.msra.mxu0 %v122
    %145 = vmatpush.msra.mxu0 %v121
    %146 = vmatpush.msra.mxu0 %v120
    %147 = vmatpush.msra.mxu0 %v119
    %148 = vmatpush.msra.mxu0 %v118
    %149 = vmatmul.f32.gmra.mxu0 %v128
    %v150 = vpop.f32.mrf.mxu0
    %v151 = vadd.f32 0.0, %v150
    %152 = vmatmul.f32.gmra.mxu0 %v131
    %v153 = vpop.f32.mrf.mxu0
    %v154 = vadd.f32 0.0, %v153
    %155 = vdwg.mxu0
    %v156 = vld [vmem:[#allocation5 + $0x88] sm:$0xff]
    %v157 = vld [vmem:[#allocation5 + $0x90] sm:$0xff]
    %v158 = vld [vmem:[#allocation5 + $0x98] sm:$0xff]
    %v159 = vld [vmem:[#allocation5 + $0xa0] sm:$0xff]
    %v160 = vld [vmem:[#allocation5 + $0xa8] sm:$0xff]
    %v161 = vld [vmem:[#allocation5 + $0xb0] sm:$0xff]
    %v162 = vld [vmem:[#allocation5 + $0xb8] sm:$0xff]
    %v163 = vld [vmem:[#allocation5 + $0xc0] sm:$0xff]
    %v164 = vld [vmem:[#allocation5 + $0xc8] sm:$0xff]
    %v165 = vld [vmem:[#allocation5 + $0xd0] sm:$0xff]
    %v166 = vld [vmem:[#allocation5 + $0xd8] sm:$0xff]
    %v167 = vld [vmem:[#allocation5 + $0xe0] sm:$0xff]
    %v168 = vld [vmem:[#allocation5 + $0xe8] sm:$0xff]
    %v169 = vld [vmem:[#allocation5 + $0xf0] sm:$0xff]
    %v170 = vld [vmem:[#allocation5 + $0xf8] sm:$0xff]
    %v171 = vld [vmem:[#allocation5 + $0x100] sm:$0xff]
    %v172 = vld [vmem:[#allocation5 + $0x108] sm:$0xff]
    %v173 = vld [vmem:[#allocation5 + $0x110] sm:$0xff]
    %v174 = vld [vmem:[#allocation5 + $0x118] sm:$0xff]
    %v175 = vld [vmem:[#allocation5 + $0x120] sm:$0xff]
    %v176 = vld [vmem:[#allocation5 + $0x128] sm:$0xff]
    %v177 = vld [vmem:[#allocation5 + $0x130] sm:$0xff]
    %v178 = vld [vmem:[#allocation5 + $0x138] sm:$0xff]
    %v179 = vld [vmem:[#allocation5 + $0x140] sm:$0xff]
    %v180 = vld [vmem:[#allocation5 + $0x148] sm:$0xff]
    %v181 = vld [vmem:[#allocation5 + $0x150] sm:$0xff]
    %v182 = vld [vmem:[#allocation5 + $0x158] sm:$0xff]
    %v183 = vld [vmem:[#allocation5 + $0x160] sm:$0xff]
    %v184 = vld [vmem:[#allocation5 + $0x168] sm:$0xff]
    %v185 = vld [vmem:[#allocation5 + $0x170] sm:$0xff]
    %v186 = vld [vmem:[#allocation5 + $0x178] sm:$0xff]
    %v187 = vld [vmem:[#allocation5 + $0x180] sm:$0xff]
    %v188 = vld [vmem:[#allocation5 + $0x188] sm:$0xff]
    %v189 = vld [vmem:[#allocation5 + $0x190] sm:$0xff]
    %v190 = vld [vmem:[#allocation5 + $0x198] sm:$0xff]
    %v191 = vld [vmem:[#allocation5 + $0x1a0] sm:$0xff]
    %v192 = vld [vmem:[#allocation5 + $0x1a8] sm:$0xff]
    %v193 = vld [vmem:[#allocation5 + $0x1b0] sm:$0xff]
    %v194 = vld [vmem:[#allocation5 + $0x1b8] sm:$0xff]
    %v195 = vld [vmem:[#allocation5 + $0x1c0] sm:$0xff]
    %v196 = vld [vmem:[#allocation5 + $0x1c8] sm:$0xff]
    %v197 = vld [vmem:[#allocation5 + $0x1d0] sm:$0xff]
    %v198 = vld [vmem:[#allocation5 + $0x1d8] sm:$0xff]
    %v199 = vld [vmem:[#allocation5 + $0x1e0] sm:$0xff]
    %v200 = vld [vmem:[#allocation5 + $0x1e8] sm:$0xff]
    %v201 = vld [vmem:[#allocation5 + $0x1f0] sm:$0xff]
    %v202 = vld [vmem:[#allocation5 + $0x1f8] sm:$0xff]
    %v203 = vld [vmem:[#allocation5 + $0x200] sm:$0xff]
    %v204 = vld [vmem:[#allocation5 + $0x208] sm:$0xff]
    %v205 = vld [vmem:[#allocation5 + $0x210] sm:$0xff]
    %v206 = vld [vmem:[#allocation5 + $0x218] sm:$0xff]
    %v207 = vld [vmem:[#allocation5 + $0x220] sm:$0xff]
    %v208 = vld [vmem:[#allocation5 + $0x228] sm:$0xff]
    %v209 = vld [vmem:[#allocation5 + $0x230] sm:$0xff]
    %v210 = vld [vmem:[#allocation5 + $0x238] sm:$0xff]
    %v211 = vld [vmem:[#allocation5 + $0x240] sm:$0xff]
    %v212 = vld [vmem:[#allocation5 + $0x248] sm:$0xff]
    %v213 = vld [vmem:[#allocation5 + $0x250] sm:$0xff]
    %v214 = vld [vmem:[#allocation5 + $0x258] sm:$0xff]
    %v215 = vld [vmem:[#allocation5 + $0x260] sm:$0xff]
    %v216 = vld [vmem:[#allocation5 + $0x268] sm:$0xff]
    %v217 = vld [vmem:[#allocation5 + $0x270] sm:$0xff]
    %v218 = vld [vmem:[#allocation5 + $0x278] sm:$0xff]
    %v219 = vld [vmem:[#allocation5 + $0x280] sm:$0xff]
    %vm220 = vcmask 130048
    %v222 = vsel %vm220, %v156, 0
    %v225 = vsel %vm220, %v157, 0
    %v228 = vsel %vm220, %v158, 0
    %v231 = vsel %vm220, %v159, 0
    %v234 = vsel %vm220, %v160, 0
    %v237 = vsel %vm220, %v161, 0
    %v240 = vsel %vm220, %v162, 0
    %v243 = vsel %vm220, %v163, 0
    %v246 = vsel %vm220, %v164, 0
    %v249 = vsel %vm220, %v165, 0
    %v252 = vsel %vm220, %v166, 0
    %v255 = vsel %vm220, %v167, 0
    %v258 = vsel %vm220, %v168, 0
    %v261 = vsel %vm220, %v169, 0
    %v264 = vsel %vm220, %v170, 0
    %v267 = vsel %vm220, %v171, 0
    %v270 = vsel %vm220, %v172, 0
    %v273 = vsel %vm220, %v173, 0
    %v276 = vsel %vm220, %v174, 0
    %v279 = vsel %vm220, %v175, 0
    %v282 = vsel %vm220, %v176, 0
    %v285 = vsel %vm220, %v177, 0
    %v288 = vsel %vm220, %v178, 0
    %v291 = vsel %vm220, %v179, 0
    %v294 = vsel %vm220, %v180, 0
    %v297 = vsel %vm220, %v181, 0
    %v300 = vsel %vm220, %v182, 0
    %v303 = vsel %vm220, %v183, 0
    %v306 = vsel %vm220, %v184, 0
    %v309 = vsel %vm220, %v185, 0
    %v312 = vsel %vm220, %v186, 0
    %v315 = vsel %vm220, %v187, 0
    %v318 = vsel %vm220, %v188, 0
    %v321 = vsel %vm220, %v189, 0
    %v324 = vsel %vm220, %v190, 0
    %v327 = vsel %vm220, %v191, 0
    %v330 = vsel %vm220, %v192, 0
    %v333 = vsel %vm220, %v193, 0
    %v336 = vsel %vm220, %v194, 0
    %v339 = vsel %vm220, %v195, 0
    %v342 = vsel %vm220, %v196, 0
    %v345 = vsel %vm220, %v197, 0
    %v348 = vsel %vm220, %v198, 0
    %v351 = vsel %vm220, %v199, 0
    %v354 = vsel %vm220, %v200, 0
    %v357 = vsel %vm220, %v201, 0
    %v360 = vsel %vm220, %v202, 0
    %v363 = vsel %vm220, %v203, 0
    %365 = vmatpush.msra.mxu0 0.0
    %366 = vmatpush.msra.mxu0 0.0
    %367 = vmatpush.msra.mxu0 0.0
    %368 = vmatpush.msra.mxu0 0.0
    %369 = vmatpush.msra.mxu0 0.0
    %370 = vmatpush.msra.mxu0 0.0
    %371 = vmatpush.msra.mxu0 0.0
    %372 = vmatpush.msra.mxu0 0.0
    %373 = vmatpush.msra.mxu0 0.0
    %374 = vmatpush.msra.mxu0 0.0
    %375 = vmatpush.msra.mxu0 0.0
    %376 = vmatpush.msra.mxu0 0.0
    %377 = vmatpush.msra.mxu0 0.0
    %378 = vmatpush.msra.mxu0 0.0
    %379 = vmatpush.msra.mxu0 %v154
    %380 = vmatpush.msra.mxu0 %v151
    %381 = vmatmul.f32.gmra.mxu0 %v222
    %v382 = vpop.f32.mrf.mxu0
    %v383 = vadd.f32 0.0, %v382
    %384 = vmatmul.f32.gmra.mxu0 %v225
    %v385 = vpop.f32.mrf.mxu0
    %v386 = vadd.f32 0.0, %v385
    %387 = vmatmul.f32.gmra.mxu0 %v228
    %v388 = vpop.f32.mrf.mxu0
    %v389 = vadd.f32 0.0, %v388
    %390 = vmatmul.f32.gmra.mxu0 %v231
    %v391 = vpop.f32.mrf.mxu0
    %v392 = vadd.f32 0.0, %v391
    %393 = vmatmul.f32.gmra.mxu0 %v234
    %v394 = vpop.f32.mrf.mxu0
    %v395 = vadd.f32 0.0, %v394
    %396 = vmatmul.f32.gmra.mxu0 %v237
    %v397 = vpop.f32.mrf.mxu0
    %v398 = vadd.f32 0.0, %v397
    %399 = vmatmul.f32.gmra.mxu0 %v240
    %v400 = vpop.f32.mrf.mxu0
    %v401 = vadd.f32 0.0, %v400
    %402 = vmatmul.f32.gmra.mxu0 %v243
    %v403 = vpop.f32.mrf.mxu0
    %v404 = vadd.f32 0.0, %v403
    %405 = vmatmul.f32.gmra.mxu0 %v246
    %v406 = vpop.f32.mrf.mxu0
    %v407 = vadd.f32 0.0, %v406
    %408 = vmatmul.f32.gmra.mxu0 %v249
    %v409 = vpop.f32.mrf.mxu0
    %v410 = vadd.f32 0.0, %v409
    %411 = vmatmul.f32.gmra.mxu0 %v252
    %v412 = vpop.f32.mrf.mxu0
    %v413 = vadd.f32 0.0, %v412
    %414 = vmatmul.f32.gmra.mxu0 %v255
    %v415 = vpop.f32.mrf.mxu0
    %v416 = vadd.f32 0.0, %v415
    %417 = vmatmul.f32.gmra.mxu0 %v258
    %v418 = vpop.f32.mrf.mxu0
    %v419 = vadd.f32 0.0, %v418
    %420 = vmatmul.f32.gmra.mxu0 %v261
    %v421 = vpop.f32.mrf.mxu0
    %v422 = vadd.f32 0.0, %v421
    %423 = vmatmul.f32.gmra.mxu0 %v264
    %v424 = vpop.f32.mrf.mxu0
    %v425 = vadd.f32 0.0, %v424
    %426 = vmatmul.f32.gmra.mxu0 %v267
    %v427 = vpop.f32.mrf.mxu0
    %v428 = vadd.f32 0.0, %v427
    %429 = vmatmul.f32.gmra.mxu0 %v270
    %v430 = vpop.f32.mrf.mxu0
    %v431 = vadd.f32 0.0, %v430
    %432 = vmatmul.f32.gmra.mxu0 %v273
    %v433 = vpop.f32.mrf.mxu0
    %v434 = vadd.f32 0.0, %v433
    %435 = vmatmul.f32.gmra.mxu0 %v276
    %v436 = vpop.f32.mrf.mxu0
    %v437 = vadd.f32 0.0, %v436
    %438 = vmatmul.f32.gmra.mxu0 %v279
    %v439 = vpop.f32.mrf.mxu0
    %v440 = vadd.f32 0.0, %v439
    %441 = vmatmul.f32.gmra.mxu0 %v282
    %v442 = vpop.f32.mrf.mxu0
    %v443 = vadd.f32 0.0, %v442
    %444 = vmatmul.f32.gmra.mxu0 %v285
    %v445 = vpop.f32.mrf.mxu0
    %v446 = vadd.f32 0.0, %v445
    %447 = vmatmul.f32.gmra.mxu0 %v288
    %v448 = vpop.f32.mrf.mxu0
    %v449 = vadd.f32 0.0, %v448
    %450 = vmatmul.f32.gmra.mxu0 %v291
    %v451 = vpop.f32.mrf.mxu0
    %v452 = vadd.f32 0.0, %v451
    %453 = vmatmul.f32.gmra.mxu0 %v294
    %v454 = vpop.f32.mrf.mxu0
    %v455 = vadd.f32 0.0, %v454
    %456 = vmatmul.f32.gmra.mxu0 %v297
    %v457 = vpop.f32.mrf.mxu0
    %v458 = vadd.f32 0.0, %v457
    %459 = vmatmul.f32.gmra.mxu0 %v300
    %v460 = vpop.f32.mrf.mxu0
    %v461 = vadd.f32 0.0, %v460
    %462 = vmatmul.f32.gmra.mxu0 %v303
    %v463 = vpop.f32.mrf.mxu0
    %v464 = vadd.f32 0.0, %v463
    %465 = vmatmul.f32.gmra.mxu0 %v306
    %v466 = vpop.f32.mrf.mxu0
    %v467 = vadd.f32 0.0, %v466
    %468 = vmatmul.f32.gmra.mxu0 %v309
    %v469 = vpop.f32.mrf.mxu0
    %v470 = vadd.f32 0.0, %v469
    %471 = vmatmul.f32.gmra.mxu0 %v312
    %v472 = vpop.f32.mrf.mxu0
    %v473 = vadd.f32 0.0, %v472
    %474 = vmatmul.f32.gmra.mxu0 %v315
    %v475 = vpop.f32.mrf.mxu0
    %v476 = vadd.f32 0.0, %v475
    %477 = vmatmul.f32.gmra.mxu0 %v318
    %v478 = vpop.f32.mrf.mxu0
    %v479 = vadd.f32 0.0, %v478
    %480 = vmatmul.f32.gmra.mxu0 %v321
    %v481 = vpop.f32.mrf.mxu0
    %v482 = vadd.f32 0.0, %v481
    %483 = vmatmul.f32.gmra.mxu0 %v324
    %v484 = vpop.f32.mrf.mxu0
    %v485 = vadd.f32 0.0, %v484
    %486 = vmatmul.f32.gmra.mxu0 %v327
    %v487 = vpop.f32.mrf.mxu0
    %v488 = vadd.f32 0.0, %v487
    %489 = vmatmul.f32.gmra.mxu0 %v330
    %v490 = vpop.f32.mrf.mxu0
    %v491 = vadd.f32 0.0, %v490
    %492 = vmatmul.f32.gmra.mxu0 %v333
    %v493 = vpop.f32.mrf.mxu0
    %v494 = vadd.f32 0.0, %v493
    %495 = vmatmul.f32.gmra.mxu0 %v336
    %v496 = vpop.f32.mrf.mxu0
    %v497 = vadd.f32 0.0, %v496
    %498 = vmatmul.f32.gmra.mxu0 %v339
    %v499 = vpop.f32.mrf.mxu0
    %v500 = vadd.f32 0.0, %v499
    %501 = vmatmul.f32.gmra.mxu0 %v342
    %v502 = vpop.f32.mrf.mxu0
    %v503 = vadd.f32 0.0, %v502
    %504 = vmatmul.f32.gmra.mxu0 %v345
    %v505 = vpop.f32.mrf.mxu0
    %v506 = vadd.f32 0.0, %v505
    %507 = vmatmul.f32.gmra.mxu0 %v348
    %v508 = vpop.f32.mrf.mxu0
    %v509 = vadd.f32 0.0, %v508
    %510 = vmatmul.f32.gmra.mxu0 %v351
    %v511 = vpop.f32.mrf.mxu0
    %v512 = vadd.f32 0.0, %v511
    %513 = vmatmul.f32.gmra.mxu0 %v354
    %v514 = vpop.f32.mrf.mxu0
    %v515 = vadd.f32 0.0, %v514
    %516 = vmatmul.f32.gmra.mxu0 %v357
    %v517 = vpop.f32.mrf.mxu0
    %v518 = vadd.f32 0.0, %v517
    %519 = vmatmul.f32.gmra.mxu0 %v360
    %v520 = vpop.f32.mrf.mxu0
    %v521 = vadd.f32 0.0, %v520
    %522 = vmatmul.f32.gmra.mxu0 %v363
    %v523 = vpop.f32.mrf.mxu0
    %v524 = vadd.f32 0.0, %v523
    %525 = vdwg.mxu0
    %v526 = vld [vmem:[#allocation5 + $0x288] sm:$0xff]
    %v527 = vld [vmem:[#allocation5 + $0x290] sm:$0xff]
    %vm528 = vcmask 64512
    %v530 = vsel %vm528, %v479, 0
    %v533 = vsel %vm528, %v482, 0
    %v536 = vsel %vm528, %v485, 0
    %v539 = vsel %vm528, %v488, 0
    %v542 = vsel %vm528, %v491, 0
    %v545 = vsel %vm528, %v494, 0
    %v548 = vsel %vm528, %v497, 0
    %v551 = vsel %vm528, %v500, 0
    %v554 = vsel %vm528, %v503, 0
    %v557 = vsel %vm528, %v506, 0
    %v560 = vsel %vm528, %v509, 0
    %v563 = vsel %vm528, %v512, 0
    %v566 = vsel %vm528, %v515, 0
    %v569 = vsel %vm528, %v518, 0
    %v572 = vsel %vm528, %v521, 0
    %v575 = vsel %vm528, %v524, 0
    %577 = vmatpush.msra.mxu0 0.0
    %578 = vmatpush.msra.mxu0 0.0
    %579 = vmatpush.msra.mxu0 0.0
    %580 = vmatpush.msra.mxu0 0.0
    %581 = vmatpush.msra.mxu0 0.0
    %582 = vmatpush.msra.mxu0 0.0
    %583 = vmatpush.msra.mxu0 0.0
    %584 = vmatpush.msra.mxu0 0.0
    %585 = vmatpush.msra.mxu0 0.0
    %586 = vmatpush.msra.mxu0 0.0
    %587 = vmatpush.msra.mxu0 0.0
    %588 = vmatpush.msra.mxu0 0.0
    %589 = vmatpush.msra.mxu0 0.0
    %590 = vmatpush.msra.mxu0 0.0
    %591 = vmatpush.msra.mxu0 0.0
    %592 = vmatpush.msra.mxu0 %v527
    %593 = vmatmul.f32.gmra.mxu0 %v530
    %v594 = vpop.f32.mrf.mxu0
    %v595 = vadd.f32 0.0, %v594
    %596 = vmatmul.f32.gmra.mxu0 %v533
    %v597 = vpop.f32.mrf.mxu0
    %v598 = vadd.f32 0.0, %v597
    %599 = vmatmul.f32.gmra.mxu0 %v536
    %v600 = vpop.f32.mrf.mxu0
    %v601 = vadd.f32 0.0, %v600
    %602 = vmatmul.f32.gmra.mxu0 %v539
    %v603 = vpop.f32.mrf.mxu0
    %v604 = vadd.f32 0.0, %v603
    %605 = vmatmul.f32.gmra.mxu0 %v542
    %v606 = vpop.f32.mrf.mxu0
    %v607 = vadd.f32 0.0, %v606
    %608 = vmatmul.f32.gmra.mxu0 %v545
    %v609 = vpop.f32.mrf.mxu0
    %v610 = vadd.f32 0.0, %v609
    %611 = vmatmul.f32.gmra.mxu0 %v548
    %v612 = vpop.f32.mrf.mxu0
    %v613 = vadd.f32 0.0, %v612
    %614 = vmatmul.f32.gmra.mxu0 %v551
    %v615 = vpop.f32.mrf.mxu0
    %v616 = vadd.f32 0.0, %v615
    %617 = vmatmul.f32.gmra.mxu0 %v554
    %v618 = vpop.f32.mrf.mxu0
    %v619 = vadd.f32 0.0, %v618
    %620 = vmatmul.f32.gmra.mxu0 %v557
    %v621 = vpop.f32.mrf.mxu0
    %v622 = vadd.f32 0.0, %v621
    %623 = vmatmul.f32.gmra.mxu0 %v560
    %v624 = vpop.f32.mrf.mxu0
    %v625 = vadd.f32 0.0, %v624
    %626 = vmatmul.f32.gmra.mxu0 %v563
    %v627 = vpop.f32.mrf.mxu0
    %v628 = vadd.f32 0.0, %v627
    %629 = vmatmul.f32.gmra.mxu0 %v566
    %v630 = vpop.f32.mrf.mxu0
    %v631 = vadd.f32 0.0, %v630
    %632 = vmatmul.f32.gmra.mxu0 %v569
    %v633 = vpop.f32.mrf.mxu0
    %v634 = vadd.f32 0.0, %v633
    %635 = vmatmul.f32.gmra.mxu0 %v572
    %v636 = vpop.f32.mrf.mxu0
    %v637 = vadd.f32 0.0, %v636
    %638 = vmatmul.f32.gmra.mxu0 %v575
    %v639 = vpop.f32.mrf.mxu0
    %v640 = vadd.f32 0.0, %v639
    %641 = vdwg.mxu0
    %v643 = vsel %vm528, %v383, 0
    %v646 = vsel %vm528, %v386, 0
    %v649 = vsel %vm528, %v389, 0
    %v652 = vsel %vm528, %v392, 0
    %v655 = vsel %vm528, %v395, 0
    %v658 = vsel %vm528, %v398, 0
    %v661 = vsel %vm528, %v401, 0
    %v664 = vsel %vm528, %v404, 0
    %v667 = vsel %vm528, %v407, 0
    %v670 = vsel %vm528, %v410, 0
    %v673 = vsel %vm528, %v413, 0
    %v676 = vsel %vm528, %v416, 0
    %v679 = vsel %vm528, %v419, 0
    %v682 = vsel %vm528, %v422, 0
    %v685 = vsel %vm528, %v425, 0
    %v688 = vsel %vm528, %v428, 0
    %690 = vmatpush.msra.mxu0 0.0
    %691 = vmatpush.msra.mxu0 0.0
    %692 = vmatpush.msra.mxu0 0.0
    %693 = vmatpush.msra.mxu0 0.0
    %694 = vmatpush.msra.mxu0 0.0
    %695 = vmatpush.msra.mxu0 0.0
    %696 = vmatpush.msra.mxu0 0.0
    %697 = vmatpush.msra.mxu0 0.0
    %698 = vmatpush.msra.mxu0 0.0
    %699 = vmatpush.msra.mxu0 0.0
    %700 = vmatpush.msra.mxu0 0.0
    %701 = vmatpush.msra.mxu0 0.0
    %702 = vmatpush.msra.mxu0 0.0
    %703 = vmatpush.msra.mxu0 0.0
    %704 = vmatpush.msra.mxu0 0.0
    %705 = vmatpush.msra.mxu0 %v526
    %706 = vmatmul.f32.gmra.mxu0 %v643
    %v707 = vpop.f32.mrf.mxu0
    %v708 = vadd.f32 %v595, %v707
    %709 = vmatmul.f32.gmra.mxu0 %v646
    %v710 = vpop.f32.mrf.mxu0
    %v711 = vadd.f32 %v598, %v710
    %712 = vmatmul.f32.gmra.mxu0 %v649
    %v713 = vpop.f32.mrf.mxu0
    %v714 = vadd.f32 %v601, %v713
    %715 = vmatmul.f32.gmra.mxu0 %v652
    %v716 = vpop.f32.mrf.mxu0
    %v717 = vadd.f32 %v604, %v716
    %718 = vmatmul.f32.gmra.mxu0 %v655
    %v719 = vpop.f32.mrf.mxu0
    %v720 = vadd.f32 %v607, %v719
    %721 = vmatmul.f32.gmra.mxu0 %v658
    %v722 = vpop.f32.mrf.mxu0
    %v723 = vadd.f32 %v610, %v722
    %724 = vmatmul.f32.gmra.mxu0 %v661
    %v725 = vpop.f32.mrf.mxu0
    %v726 = vadd.f32 %v613, %v725
    %727 = vmatmul.f32.gmra.mxu0 %v664
    %v728 = vpop.f32.mrf.mxu0
    %v729 = vadd.f32 %v616, %v728
    %730 = vmatmul.f32.gmra.mxu0 %v667
    %v731 = vpop.f32.mrf.mxu0
    %v732 = vadd.f32 %v619, %v731
    %733 = vmatmul.f32.gmra.mxu0 %v670
    %v734 = vpop.f32.mrf.mxu0
    %v735 = vadd.f32 %v622, %v734
    %736 = vmatmul.f32.gmra.mxu0 %v673
    %v737 = vpop.f32.mrf.mxu0
    %v738 = vadd.f32 %v625, %v737
    %739 = vmatmul.f32.gmra.mxu0 %v676
    %v740 = vpop.f32.mrf.mxu0
    %v741 = vadd.f32 %v628, %v740
    %742 = vmatmul.f32.gmra.mxu0 %v679
    %v743 = vpop.f32.mrf.mxu0
    %v744 = vadd.f32 %v631, %v743
    %745 = vmatmul.f32.gmra.mxu0 %v682
    %v746 = vpop.f32.mrf.mxu0
    %v747 = vadd.f32 %v634, %v746
    %748 = vmatmul.f32.gmra.mxu0 %v685
    %v749 = vpop.f32.mrf.mxu0
    %v750 = vadd.f32 %v637, %v749
    %751 = vmatmul.f32.gmra.mxu0 %v688
    %v752 = vpop.f32.mrf.mxu0
    %v753 = vadd.f32 %v640, %v752
    %754 = vdwg.mxu0
    %v755 = vadd.f32 %v708, %v431
    %v756 = vadd.f32 %v711, %v434
    %v757 = vadd.f32 %v714, %v437
    %v758 = vadd.f32 %v717, %v440
    %v759 = vadd.f32 %v720, %v443
    %v760 = vadd.f32 %v723, %v446
    %v761 = vadd.f32 %v726, %v449
    %v762 = vadd.f32 %v729, %v452
    %v763 = vadd.f32 %v732, %v455
    %v764 = vadd.f32 %v735, %v458
    %v765 = vadd.f32 %v738, %v461
    %v766 = vadd.f32 %v741, %v464
    %v767 = vadd.f32 %v744, %v467
    %v768 = vadd.f32 %v747, %v470
    %v769 = vadd.f32 %v750, %v473
    %v770 = vadd.f32 %v753, %v476
    %772 = vset.pattern.permute.xlu0 0
    %773 = vperm.xlu0 %772, %v204
    %v774 = vpop.permute.xlu0 %773
    %777 = vset.pattern.permute.xlu0 0
    %778 = vperm.xlu0 %777, %v205
    %v779 = vpop.permute.xlu0 %778
    %782 = vset.pattern.permute.xlu0 0
    %783 = vperm.xlu0 %782, %v206
    %v784 = vpop.permute.xlu0 %783
    %787 = vset.pattern.permute.xlu0 0
    %788 = vperm.xlu0 %787, %v207
    %v789 = vpop.permute.xlu0 %788
    %792 = vset.pattern.permute.xlu0 0
    %793 = vperm.xlu0 %792, %v208
    %v794 = vpop.permute.xlu0 %793
    %797 = vset.pattern.permute.xlu0 0
    %798 = vperm.xlu0 %797, %v209
    %v799 = vpop.permute.xlu0 %798
    %802 = vset.pattern.permute.xlu0 0
    %803 = vperm.xlu0 %802, %v210
    %v804 = vpop.permute.xlu0 %803
    %807 = vset.pattern.permute.xlu0 0
    %808 = vperm.xlu0 %807, %v211
    %v809 = vpop.permute.xlu0 %808
    %812 = vset.pattern.permute.xlu0 0
    %813 = vperm.xlu0 %812, %v212
    %v814 = vpop.permute.xlu0 %813
    %817 = vset.pattern.permute.xlu0 0
    %818 = vperm.xlu0 %817, %v213
    %v819 = vpop.permute.xlu0 %818
    %822 = vset.pattern.permute.xlu0 0
    %823 = vperm.xlu0 %822, %v214
    %v824 = vpop.permute.xlu0 %823
    %827 = vset.pattern.permute.xlu0 0
    %828 = vperm.xlu0 %827, %v215
    %v829 = vpop.permute.xlu0 %828
    %832 = vset.pattern.permute.xlu0 0
    %833 = vperm.xlu0 %832, %v216
    %v834 = vpop.permute.xlu0 %833
    %837 = vset.pattern.permute.xlu0 0
    %838 = vperm.xlu0 %837, %v217
    %v839 = vpop.permute.xlu0 %838
    %842 = vset.pattern.permute.xlu0 0
    %843 = vperm.xlu0 %842, %v218
    %v844 = vpop.permute.xlu0 %843
    %847 = vset.pattern.permute.xlu0 0
    %848 = vperm.xlu0 %847, %v219
    %v849 = vpop.permute.xlu0 %848
    %v851 = vadd.f32 %v755, %v774
    %v852 = vadd.f32 %v756, %v779
    %v853 = vadd.f32 %v757, %v784
    %v854 = vadd.f32 %v758, %v789
    %v855 = vadd.f32 %v759, %v794
    %v856 = vadd.f32 %v760, %v799
    %v857 = vadd.f32 %v761, %v804
    %v858 = vadd.f32 %v762, %v809
    %v859 = vadd.f32 %v763, %v814
    %v860 = vadd.f32 %v764, %v819
    %v861 = vadd.f32 %v765, %v824
    %v862 = vadd.f32 %v766, %v829
    %v863 = vadd.f32 %v767, %v834
    %v864 = vadd.f32 %v768, %v839
    %v865 = vadd.f32 %v769, %v844
    %v866 = vadd.f32 %v770, %v849
    %v867 = vmul.f32 %v851, 0.2
    %v868 = vmul.f32 %v852, 0.2
    %v869 = vmul.f32 %v853, 0.2
    %v870 = vmul.f32 %v854, 0.2
    %v871 = vmul.f32 %v855, 0.2
    %v872 = vmul.f32 %v856, 0.2
    %v873 = vmul.f32 %v857, 0.2
    %v874 = vmul.f32 %v858, 0.2
    %v875 = vmul.f32 %v859, 0.2
    %v876 = vmul.f32 %v860, 0.2
    %v877 = vmul.f32 %v861, 0.2
    %v878 = vmul.f32 %v862, 0.2
    %v879 = vmul.f32 %v863, 0.2
    %v880 = vmul.f32 %v864, 0.2
    %v881 = vmul.f32 %v865, 0.2
    %v882 = vmul.f32 %v866, 0.2
    %v883 = vmax.f32 %v851, %v867
    %v884 = vmax.f32 %v852, %v868
    %v885 = vmax.f32 %v853, %v869
    %v886 = vmax.f32 %v854, %v870
    %v887 = vmax.f32 %v855, %v871
    %v888 = vmax.f32 %v856, %v872
    %v889 = vmax.f32 %v857, %v873
    %v890 = vmax.f32 %v858, %v874
    %v891 = vmax.f32 %v859, %v875
    %v892 = vmax.f32 %v860, %v876
    %v893 = vmax.f32 %v861, %v877
    %v894 = vmax.f32 %v862, %v878
    %v895 = vmax.f32 %v863, %v879
    %v896 = vmax.f32 %v864, %v880
    %v897 = vmax.f32 %v865, %v881
    %v898 = vmax.f32 %v866, %v882
    %v899 = vld [vmem:[#allocation5 + $0x298] sm:$0xff]
    %v900 = vld [vmem:[#allocation5 + $0x2a0] sm:$0xff]
    %v901 = vld [vmem:[#allocation5 + $0x2a8] sm:$0xff]
    %v902 = vld [vmem:[#allocation5 + $0x2b0] sm:$0xff]
    %v903 = vld [vmem:[#allocation5 + $0x2b8] sm:$0xff]
    %v904 = vld [vmem:[#allocation5 + $0x2c0] sm:$0xff]
    %v905 = vld [vmem:[#allocation5 + $0x2c8] sm:$0xff]
    %v906 = vld [vmem:[#allocation5 + $0x2d0] sm:$0xff]
    %v907 = vld [vmem:[#allocation5 + $0x2d8] sm:$0xff]
    %v908 = vld [vmem:[#allocation5 + $0x2e0] sm:$0xff]
    %v909 = vld [vmem:[#allocation5 + $0x2e8] sm:$0xff]
    %v910 = vld [vmem:[#allocation5 + $0x2f0] sm:$0xff]
    %v911 = vld [vmem:[#allocation5 + $0x2f8] sm:$0xff]
    %v912 = vld [vmem:[#allocation5 + $0x300] sm:$0xff]
    %v913 = vld [vmem:[#allocation5 + $0x308] sm:$0xff]
    %v914 = vld [vmem:[#allocation5 + $0x310] sm:$0xff]
    %v915 = vld [vmem:[#allocation5 + $0x318] sm:$0xff]
    %v916 = vld [vmem:[#allocation5 + $0x320] sm:$0xff]
    %v917 = vld [vmem:[#allocation5 + $0x328] sm:$0xff]
    %v918 = vld [vmem:[#allocation5 + $0x330] sm:$0xff]
    %v919 = vld [vmem:[#allocation5 + $0x338] sm:$0xff]
    %v920 = vld [vmem:[#allocation5 + $0x340] sm:$0xff]
    %v921 = vld [vmem:[#allocation5 + $0x348] sm:$0xff]
    %v922 = vld [vmem:[#allocation5 + $0x350] sm:$0xff]
    %v923 = vld [vmem:[#allocation5 + $0x358] sm:$0xff]
    %v924 = vld [vmem:[#allocation5 + $0x360] sm:$0xff]
    %v925 = vld [vmem:[#allocation5 + $0x368] sm:$0xff]
    %v926 = vld [vmem:[#allocation5 + $0x370] sm:$0xff]
    %v927 = vld [vmem:[#allocation5 + $0x378] sm:$0xff]
    %v928 = vld [vmem:[#allocation5 + $0x380] sm:$0xff]
    %v929 = vld [vmem:[#allocation5 + $0x388] sm:$0xff]
    %v930 = vld [vmem:[#allocation5 + $0x390] sm:$0xff]
    %931 = vmatpush.msra.mxu0 %v898
    %932 = vmatpush.msra.mxu0 %v897
    %933 = vmatpush.msra.mxu0 %v896
    %934 = vmatpush.msra.mxu0 %v895
    %935 = vmatpush.msra.mxu0 %v894
    %936 = vmatpush.msra.mxu0 %v893
    %937 = vmatpush.msra.mxu0 %v892
    %938 = vmatpush.msra.mxu0 %v891
    %939 = vmatpush.msra.mxu0 %v890
    %940 = vmatpush.msra.mxu0 %v889
    %941 = vmatpush.msra.mxu0 %v888
    %942 = vmatpush.msra.mxu0 %v887
    %943 = vmatpush.msra.mxu0 %v886
    %944 = vmatpush.msra.mxu0 %v885
    %945 = vmatpush.msra.mxu0 %v884
    %946 = vmatpush.msra.mxu0 %v883
    %947 = vmatmul.f32.gmra.mxu0 %v899
    %v948 = vpop.f32.mrf.mxu0
    %v949 = vadd.f32 0.0, %v948
    %950 = vmatmul.f32.gmra.mxu0 %v900
    %v951 = vpop.f32.mrf.mxu0
    %v952 = vadd.f32 0.0, %v951
    %953 = vmatmul.f32.gmra.mxu0 %v901
    %v954 = vpop.f32.mrf.mxu0
    %v955 = vadd.f32 0.0, %v954
    %956 = vmatmul.f32.gmra.mxu0 %v902
    %v957 = vpop.f32.mrf.mxu0
    %v958 = vadd.f32 0.0, %v957
    %959 = vmatmul.f32.gmra.mxu0 %v903
    %v960 = vpop.f32.mrf.mxu0
    %v961 = vadd.f32 0.0, %v960
    %962 = vmatmul.f32.gmra.mxu0 %v904
    %v963 = vpop.f32.mrf.mxu0
    %v964 = vadd.f32 0.0, %v963
    %965 = vmatmul.f32.gmra.mxu0 %v905
    %v966 = vpop.f32.mrf.mxu0
    %v967 = vadd.f32 0.0, %v966
    %968 = vmatmul.f32.gmra.mxu0 %v906
    %v969 = vpop.f32.mrf.mxu0
    %v970 = vadd.f32 0.0, %v969
    %971 = vmatmul.f32.gmra.mxu0 %v907
    %v972 = vpop.f32.mrf.mxu0
    %v973 = vadd.f32 0.0, %v972
    %974 = vmatmul.f32.gmra.mxu0 %v908
    %v975 = vpop.f32.mrf.mxu0
    %v976 = vadd.f32 0.0, %v975
    %977 = vmatmul.f32.gmra.mxu0 %v909
    %v978 = vpop.f32.mrf.mxu0
    %v979 = vadd.f32 0.0, %v978
    %980 = vmatmul.f32.gmra.mxu0 %v910
    %v981 = vpop.f32.mrf.mxu0
    %v982 = vadd.f32 0.0, %v981
    %983 = vmatmul.f32.gmra.mxu0 %v911
    %v984 = vpop.f32.mrf.mxu0
    %v985 = vadd.f32 0.0, %v984
    %986 = vmatmul.f32.gmra.mxu0 %v912
    %v987 = vpop.f32.mrf.mxu0
    %v988 = vadd.f32 0.0, %v987
    %989 = vmatmul.f32.gmra.mxu0 %v913
    %v990 = vpop.f32.mrf.mxu0
    %v991 = vadd.f32 0.0, %v990
    %992 = vmatmul.f32.gmra.mxu0 %v914
    %v993 = vpop.f32.mrf.mxu0
    %v994 = vadd.f32 0.0, %v993
    %995 = vmatmul.f32.gmra.mxu0 %v915
    %v996 = vpop.f32.mrf.mxu0
    %v997 = vadd.f32 0.0, %v996
    %998 = vmatmul.f32.gmra.mxu0 %v916
    %v999 = vpop.f32.mrf.mxu0
    %v1000 = vadd.f32 0.0, %v999
    %1001 = vmatmul.f32.gmra.mxu0 %v917
    %v1002 = vpop.f32.mrf.mxu0
    %v1003 = vadd.f32 0.0, %v1002
    %1004 = vmatmul.f32.gmra.mxu0 %v918
    %v1005 = vpop.f32.mrf.mxu0
    %v1006 = vadd.f32 0.0, %v1005
    %1007 = vmatmul.f32.gmra.mxu0 %v919
    %v1008 = vpop.f32.mrf.mxu0
    %v1009 = vadd.f32 0.0, %v1008
    %1010 = vmatmul.f32.gmra.mxu0 %v920
    %v1011 = vpop.f32.mrf.mxu0
    %v1012 = vadd.f32 0.0, %v1011
    %1013 = vmatmul.f32.gmra.mxu0 %v921
    %v1014 = vpop.f32.mrf.mxu0
    %v1015 = vadd.f32 0.0, %v1014
    %1016 = vmatmul.f32.gmra.mxu0 %v922
    %v1017 = vpop.f32.mrf.mxu0
    %v1018 = vadd.f32 0.0, %v1017
    %1019 = vdwg.mxu0
    %v1020 = vld [vmem:[#allocation5 + $0x398] sm:$0xff]
    %v1021 = vld [vmem:[#allocation5 + $0x3a8] sm:$0xff]
    %v1023 = vsel %vm528, %v997, 0
    %v1026 = vsel %vm528, %v1000, 0
    %v1029 = vsel %vm528, %v1003, 0
    %v1032 = vsel %vm528, %v1006, 0
    %v1035 = vsel %vm528, %v1009, 0
    %v1038 = vsel %vm528, %v1012, 0
    %v1041 = vsel %vm528, %v1015, 0
    %v1044 = vsel %vm528, %v1018, 0
    %1046 = vmatpush.msra.mxu0 0.0
    %1047 = vmatpush.msra.mxu0 0.0
    %1048 = vmatpush.msra.mxu0 0.0
    %1049 = vmatpush.msra.mxu0 0.0
    %1050 = vmatpush.msra.mxu0 0.0
    %1051 = vmatpush.msra.mxu0 0.0
    %1052 = vmatpush.msra.mxu0 0.0
    %1053 = vmatpush.msra.mxu0 0.0
    %1054 = vmatpush.msra.mxu0 0.0
    %1055 = vmatpush.msra.mxu0 0.0
    %1056 = vmatpush.msra.mxu0 0.0
    %1057 = vmatpush.msra.mxu0 0.0
    %1058 = vmatpush.msra.mxu0 0.0
    %1059 = vmatpush.msra.mxu0 0.0
    %1060 = vmatpush.msra.mxu0 0.0
    %1061 = vmatpush.msra.mxu0 %v1021
    %1062 = vmatmul.f32.gmra.mxu0 %v1023
    %v1063 = vpop.f32.mrf.mxu0
    %v1064 = vadd.f32 0.0, %v1063
    %1065 = vmatmul.f32.gmra.mxu0 %v1026
    %v1066 = vpop.f32.mrf.mxu0
    %v1067 = vadd.f32 0.0, %v1066
    %1068 = vmatmul.f32.gmra.mxu0 %v1029
    %v1069 = vpop.f32.mrf.mxu0
    %v1070 = vadd.f32 0.0, %v1069
    %1071 = vmatmul.f32.gmra.mxu0 %v1032
    %v1072 = vpop.f32.mrf.mxu0
    %v1073 = vadd.f32 0.0, %v1072
    %1074 = vmatmul.f32.gmra.mxu0 %v1035
    %v1075 = vpop.f32.mrf.mxu0
    %v1076 = vadd.f32 0.0, %v1075
    %1077 = vmatmul.f32.gmra.mxu0 %v1038
    %v1078 = vpop.f32.mrf.mxu0
    %v1079 = vadd.f32 0.0, %v1078
    %1080 = vmatmul.f32.gmra.mxu0 %v1041
    %v1081 = vpop.f32.mrf.mxu0
    %v1082 = vadd.f32 0.0, %v1081
    %1083 = vmatmul.f32.gmra.mxu0 %v1044
    %v1084 = vpop.f32.mrf.mxu0
    %v1085 = vadd.f32 0.0, %v1084
    %1086 = vdwg.mxu0
    %v1088 = vsel %vm528, %v949, 0
    %v1091 = vsel %vm528, %v952, 0
    %v1094 = vsel %vm528, %v955, 0
    %v1097 = vsel %vm528, %v958, 0
    %v1100 = vsel %vm528, %v961, 0
    %v1103 = vsel %vm528, %v964, 0
    %v1106 = vsel %vm528, %v967, 0
    %v1109 = vsel %vm528, %v970, 0
    %1111 = vmatpush.msra.mxu0 0.0
    %1112 = vmatpush.msra.mxu0 0.0
    %1113 = vmatpush.msra.mxu0 0.0
    %1114 = vmatpush.msra.mxu0 0.0
    %1115 = vmatpush.msra.mxu0 0.0
    %1116 = vmatpush.msra.mxu0 0.0
    %1117 = vmatpush.msra.mxu0 0.0
    %1118 = vmatpush.msra.mxu0 0.0
    %1119 = vmatpush.msra.mxu0 0.0
    %1120 = vmatpush.msra.mxu0 0.0
    %1121 = vmatpush.msra.mxu0 0.0
    %1122 = vmatpush.msra.mxu0 0.0
    %1123 = vmatpush.msra.mxu0 0.0
    %1124 = vmatpush.msra.mxu0 0.0
    %1125 = vmatpush.msra.mxu0 0.0
    %1126 = vmatpush.msra.mxu0 %v1020
    %1127 = vmatmul.f32.gmra.mxu0 %v1088
    %v1128 = vpop.f32.mrf.mxu0
    %v1129 = vadd.f32 %v1064, %v1128
    %1130 = vmatmul.f32.gmra.mxu0 %v1091
    %v1131 = vpop.f32.mrf.mxu0
    %v1132 = vadd.f32 %v1067, %v1131
    %1133 = vmatmul.f32.gmra.mxu0 %v1094
    %v1134 = vpop.f32.mrf.mxu0
    %v1135 = vadd.f32 %v1070, %v1134
    %1136 = vmatmul.f32.gmra.mxu0 %v1097
    %v1137 = vpop.f32.mrf.mxu0
    %v1138 = vadd.f32 %v1073, %v1137
    %1139 = vmatmul.f32.gmra.mxu0 %v1100
    %v1140 = vpop.f32.mrf.mxu0
    %v1141 = vadd.f32 %v1076, %v1140
    %1142 = vmatmul.f32.gmra.mxu0 %v1103
    %v1143 = vpop.f32.mrf.mxu0
    %v1144 = vadd.f32 %v1079, %v1143
    %1145 = vmatmul.f32.gmra.mxu0 %v1106
    %v1146 = vpop.f32.mrf.mxu0
    %v1147 = vadd.f32 %v1082, %v1146
    %1148 = vmatmul.f32.gmra.mxu0 %v1109
    %v1149 = vpop.f32.mrf.mxu0
    %v1150 = vadd.f32 %v1085, %v1149
    %1151 = vdwg.mxu0
    %v1152 = vld [vmem:[#allocation5 + $0x3a0] sm:$0xff]
    %v1154 = vsel %vm528, %v973, 0
    %v1157 = vsel %vm528, %v976, 0
    %v1160 = vsel %vm528, %v979, 0
    %v1163 = vsel %vm528, %v982, 0
    %v1166 = vsel %vm528, %v985, 0
    %v1169 = vsel %vm528, %v988, 0
    %v1172 = vsel %vm528, %v991, 0
    %v1175 = vsel %vm528, %v994, 0
    %1177 = vmatpush.msra.mxu0 0.0
    %1178 = vmatpush.msra.mxu0 0.0
    %1179 = vmatpush.msra.mxu0 0.0
    %1180 = vmatpush.msra.mxu0 0.0
    %1181 = vmatpush.msra.mxu0 0.0
    %1182 = vmatpush.msra.mxu0 0.0
    %1183 = vmatpush.msra.mxu0 0.0
    %1184 = vmatpush.msra.mxu0 0.0
    %1185 = vmatpush.msra.mxu0 0.0
    %1186 = vmatpush.msra.mxu0 0.0
    %1187 = vmatpush.msra.mxu0 0.0
    %1188 = vmatpush.msra.mxu0 0.0
    %1189 = vmatpush.msra.mxu0 0.0
    %1190 = vmatpush.msra.mxu0 0.0
    %1191 = vmatpush.msra.mxu0 0.0
    %1192 = vmatpush.msra.mxu0 %v1152
    %1193 = vmatmul.f32.gmra.mxu0 %v1154
    %v1194 = vpop.f32.mrf.mxu0
    %v1195 = vadd.f32 0.0, %v1194
    %1196 = vmatmul.f32.gmra.mxu0 %v1157
    %v1197 = vpop.f32.mrf.mxu0
    %v1198 = vadd.f32 0.0, %v1197
    %1199 = vmatmul.f32.gmra.mxu0 %v1160
    %v1200 = vpop.f32.mrf.mxu0
    %v1201 = vadd.f32 0.0, %v1200
    %1202 = vmatmul.f32.gmra.mxu0 %v1163
    %v1203 = vpop.f32.mrf.mxu0
    %v1204 = vadd.f32 0.0, %v1203
    %1205 = vmatmul.f32.gmra.mxu0 %v1166
    %v1206 = vpop.f32.mrf.mxu0
    %v1207 = vadd.f32 0.0, %v1206
    %1208 = vmatmul.f32.gmra.mxu0 %v1169
    %v1209 = vpop.f32.mrf.mxu0
    %v1210 = vadd.f32 0.0, %v1209
    %1211 = vmatmul.f32.gmra.mxu0 %v1172
    %v1212 = vpop.f32.mrf.mxu0
    %v1213 = vadd.f32 0.0, %v1212
    %1214 = vmatmul.f32.gmra.mxu0 %v1175
    %v1215 = vpop.f32.mrf.mxu0
    %v1216 = vadd.f32 0.0, %v1215
    %1217 = vdwg.mxu0
    %v1218 = vadd.f32 %v1129, %v1195
    %v1219 = vadd.f32 %v1132, %v1198
    %v1220 = vadd.f32 %v1135, %v1201
    %v1221 = vadd.f32 %v1138, %v1204
    %v1222 = vadd.f32 %v1141, %v1207
    %v1223 = vadd.f32 %v1144, %v1210
    %v1224 = vadd.f32 %v1147, %v1213
    %v1225 = vadd.f32 %v1150, %v1216
    %1227 = vset.pattern.permute.xlu0 0
    %1228 = vperm.xlu0 %1227, %v923
    %v1229 = vpop.permute.xlu0 %1228
    %1232 = vset.pattern.permute.xlu0 0
    %1233 = vperm.xlu0 %1232, %v924
    %v1234 = vpop.permute.xlu0 %1233
    %1237 = vset.pattern.permute.xlu0 0
    %1238 = vperm.xlu0 %1237, %v925
    %v1239 = vpop.permute.xlu0 %1238
    %1242 = vset.pattern.permute.xlu0 0
    %1243 = vperm.xlu0 %1242, %v926
    %v1244 = vpop.permute.xlu0 %1243
    %1247 = vset.pattern.permute.xlu0 0
    %1248 = vperm.xlu0 %1247, %v927
    %v1249 = vpop.permute.xlu0 %1248
    %1252 = vset.pattern.permute.xlu0 0
    %1253 = vperm.xlu0 %1252, %v928
    %v1254 = vpop.permute.xlu0 %1253
    %1257 = vset.pattern.permute.xlu0 0
    %1258 = vperm.xlu0 %1257, %v929
    %v1259 = vpop.permute.xlu0 %1258
    %1262 = vset.pattern.permute.xlu0 0
    %1263 = vperm.xlu0 %1262, %v930
    %v1264 = vpop.permute.xlu0 %1263
    %v1266 = vadd.f32 %v1218, %v1229
    %v1267 = vadd.f32 %v1219, %v1234
    %v1268 = vadd.f32 %v1220, %v1239
    %v1269 = vadd.f32 %v1221, %v1244
    %v1270 = vadd.f32 %v1222, %v1249
    %v1271 = vadd.f32 %v1223, %v1254
    %v1272 = vadd.f32 %v1224, %v1259
    %v1273 = vadd.f32 %v1225, %v1264
    %v1274 = vmul.f32 %v1266, 0.2
    %v1275 = vmul.f32 %v1267, 0.2
    %v1276 = vmul.f32 %v1268, 0.2
    %v1277 = vmul.f32 %v1269, 0.2
    %v1278 = vmul.f32 %v1270, 0.2
    %v1279 = vmul.f32 %v1271, 0.2
    %v1280 = vmul.f32 %v1272, 0.2
    %v1281 = vmul.f32 %v1273, 0.2
    %v1282 = vmax.f32 %v1266, %v1274
    %v1283 = vmax.f32 %v1267, %v1275
    %v1284 = vmax.f32 %v1268, %v1276
    %v1285 = vmax.f32 %v1269, %v1277
    %v1286 = vmax.f32 %v1270, %v1278
    %v1287 = vmax.f32 %v1271, %v1279
    %v1288 = vmax.f32 %v1272, %v1280
    %v1289 = vmax.f32 %v1273, %v1281
    %v1290 = vld [vmem:[#allocation5 + $0x3b0] sm:$0xff]
    %v1291 = vld [vmem:[#allocation5 + $0x3b8] sm:$0xff]
    %v1292 = vld [vmem:[#allocation5 + $0x3c0] sm:$0xff]
    %v1293 = vld [vmem:[#allocation5 + $0x3c8] sm:$0xff]
    %v1294 = vld [vmem:[#allocation5 + $0x3d0] sm:$0xff]
    %v1295 = vld [vmem:[#allocation5 + $0x3d8] sm:$0xff]
    %v1296 = vld [vmem:[#allocation5 + $0x3e0] sm:$0xff]
    %v1297 = vld [vmem:[#allocation5 + $0x3e8] sm:$0xff]
    %v1298 = vld [vmem:[#allocation5 + $0x3f0] sm:$0xff]
    %v1299 = vld [vmem:[#allocation5 + $0x3f8] sm:$0xff]
    %v1300 = vld [vmem:[#allocation5 + $0x400] sm:$0xff]
    %v1301 = vld [vmem:[#allocation5 + $0x408] sm:$0xff]
    %v1302 = vld [vmem:[#allocation5 + $0x410] sm:$0xff]
    %v1303 = vld [vmem:[#allocation5 + $0x418] sm:$0xff]
    %v1304 = vld [vmem:[#allocation5 + $0x420] sm:$0xff]
    %v1305 = vld [vmem:[#allocation5 + $0x428] sm:$0xff]
    %v1307 = vsel %vm126, %v1290, 0
    %v1310 = vsel %vm126, %v1291, 0
    %v1313 = vsel %vm126, %v1292, 0
    %v1316 = vsel %vm126, %v1293, 0
    %v1319 = vsel %vm126, %v1294, 0
    %v1322 = vsel %vm126, %v1295, 0
    %v1325 = vsel %vm126, %v1296, 0
    %v1328 = vsel %vm126, %v1297, 0
    %v1331 = vsel %vm126, %v1298, 0
    %v1334 = vsel %vm126, %v1299, 0
    %v1337 = vsel %vm126, %v1300, 0
    %v1340 = vsel %vm126, %v1301, 0
    %1342 = vmatpush.msra.mxu0 0.0
    %1343 = vmatpush.msra.mxu0 0.0
    %1344 = vmatpush.msra.mxu0 0.0
    %1345 = vmatpush.msra.mxu0 0.0
    %1346 = vmatpush.msra.mxu0 0.0
    %1347 = vmatpush.msra.mxu0 0.0
    %1348 = vmatpush.msra.mxu0 0.0
    %1349 = vmatpush.msra.mxu0 0.0
    %1350 = vmatpush.msra.mxu0 %v1289
    %1351 = vmatpush.msra.mxu0 %v1288
    %1352 = vmatpush.msra.mxu0 %v1287
    %1353 = vmatpush.msra.mxu0 %v1286
    %1354 = vmatpush.msra.mxu0 %v1285
    %1355 = vmatpush.msra.mxu0 %v1284
    %1356 = vmatpush.msra.mxu0 %v1283
    %1357 = vmatpush.msra.mxu0 %v1282
    %1358 = vmatmul.f32.gmra.mxu0 %v1307
    %v1359 = vpop.f32.mrf.mxu0
    %v1360 = vadd.f32 0.0, %v1359
    %1361 = vmatmul.f32.gmra.mxu0 %v1310
    %v1362 = vpop.f32.mrf.mxu0
    %v1363 = vadd.f32 0.0, %v1362
    %1364 = vmatmul.f32.gmra.mxu0 %v1313
    %v1365 = vpop.f32.mrf.mxu0
    %v1366 = vadd.f32 0.0, %v1365
    %1367 = vmatmul.f32.gmra.mxu0 %v1316
    %v1368 = vpop.f32.mrf.mxu0
    %v1369 = vadd.f32 0.0, %v1368
    %1370 = vmatmul.f32.gmra.mxu0 %v1319
    %v1371 = vpop.f32.mrf.mxu0
    %v1372 = vadd.f32 0.0, %v1371
    %1373 = vmatmul.f32.gmra.mxu0 %v1322
    %v1374 = vpop.f32.mrf.mxu0
    %v1375 = vadd.f32 0.0, %v1374
    %1376 = vmatmul.f32.gmra.mxu0 %v1325
    %v1377 = vpop.f32.mrf.mxu0
    %v1378 = vadd.f32 0.0, %v1377
    %1379 = vmatmul.f32.gmra.mxu0 %v1328
    %v1380 = vpop.f32.mrf.mxu0
    %v1381 = vadd.f32 0.0, %v1380
    %1382 = vmatmul.f32.gmra.mxu0 %v1331
    %v1383 = vpop.f32.mrf.mxu0
    %v1384 = vadd.f32 0.0, %v1383
    %1385 = vmatmul.f32.gmra.mxu0 %v1334
    %v1386 = vpop.f32.mrf.mxu0
    %v1387 = vadd.f32 0.0, %v1386
    %1388 = vmatmul.f32.gmra.mxu0 %v1337
    %v1389 = vpop.f32.mrf.mxu0
    %v1390 = vadd.f32 0.0, %v1389
    %1391 = vmatmul.f32.gmra.mxu0 %v1340
    %v1392 = vpop.f32.mrf.mxu0
    %v1393 = vadd.f32 0.0, %v1392
    %1394 = vdwg.mxu0
    %v1395 = vld [vmem:[#allocation5 + $0x430] sm:$0xff]
    %v1396 = vld [vmem:[#allocation5 + $0x438] sm:$0xff]
    %v1397 = vld [vmem:[#allocation5 + $0x450] sm:$0xff]
    %v1398 = vld [vmem:[#allocation5 + $0x458] sm:$0xff]
    %v1400 = vsel %vm220, %v1384, 0
    %v1403 = vsel %vm220, %v1387, 0
    %v1406 = vsel %vm220, %v1390, 0
    %v1409 = vsel %vm220, %v1393, 0
    %1411 = vmatpush.msra.mxu0 0.0
    %1412 = vmatpush.msra.mxu0 0.0
    %1413 = vmatpush.msra.mxu0 0.0
    %1414 = vmatpush.msra.mxu0 0.0
    %1415 = vmatpush.msra.mxu0 0.0
    %1416 = vmatpush.msra.mxu0 0.0
    %1417 = vmatpush.msra.mxu0 0.0
    %1418 = vmatpush.msra.mxu0 0.0
    %1419 = vmatpush.msra.mxu0 0.0
    %1420 = vmatpush.msra.mxu0 0.0
    %1421 = vmatpush.msra.mxu0 0.0
    %1422 = vmatpush.msra.mxu0 0.0
    %1423 = vmatpush.msra.mxu0 0.0
    %1424 = vmatpush.msra.mxu0 0.0
    %1425 = vmatpush.msra.mxu0 %v1398
    %1426 = vmatpush.msra.mxu0 %v1397
    %1427 = vmatmul.f32.gmra.mxu0 %v1400
    %v1428 = vpop.f32.mrf.mxu0
    %v1429 = vadd.f32 0.0, %v1428
    %1430 = vmatmul.f32.gmra.mxu0 %v1403
    %v1431 = vpop.f32.mrf.mxu0
    %v1432 = vadd.f32 0.0, %v1431
    %1433 = vmatmul.f32.gmra.mxu0 %v1406
    %v1434 = vpop.f32.mrf.mxu0
    %v1435 = vadd.f32 0.0, %v1434
    %1436 = vmatmul.f32.gmra.mxu0 %v1409
    %v1437 = vpop.f32.mrf.mxu0
    %v1438 = vadd.f32 0.0, %v1437
    %1439 = vdwg.mxu0
    %v1441 = vsel %vm220, %v1360, 0
    %v1444 = vsel %vm220, %v1363, 0
    %v1447 = vsel %vm220, %v1366, 0
    %v1450 = vsel %vm220, %v1369, 0
    %1452 = vmatpush.msra.mxu0 0.0
    %1453 = vmatpush.msra.mxu0 0.0
    %1454 = vmatpush.msra.mxu0 0.0
    %1455 = vmatpush.msra.mxu0 0.0
    %1456 = vmatpush.msra.mxu0 0.0
    %1457 = vmatpush.msra.mxu0 0.0
    %1458 = vmatpush.msra.mxu0 0.0
    %1459 = vmatpush.msra.mxu0 0.0
    %1460 = vmatpush.msra.mxu0 0.0
    %1461 = vmatpush.msra.mxu0 0.0
    %1462 = vmatpush.msra.mxu0 0.0
    %1463 = vmatpush.msra.mxu0 0.0
    %1464 = vmatpush.msra.mxu0 0.0
    %1465 = vmatpush.msra.mxu0 0.0
    %1466 = vmatpush.msra.mxu0 %v1396
    %1467 = vmatpush.msra.mxu0 %v1395
    %1468 = vmatmul.f32.gmra.mxu0 %v1441
    %v1469 = vpop.f32.mrf.mxu0
    %v1470 = vadd.f32 %v1429, %v1469
    %1471 = vmatmul.f32.gmra.mxu0 %v1444
    %v1472 = vpop.f32.mrf.mxu0
    %v1473 = vadd.f32 %v1432, %v1472
    %1474 = vmatmul.f32.gmra.mxu0 %v1447
    %v1475 = vpop.f32.mrf.mxu0
    %v1476 = vadd.f32 %v1435, %v1475
    %1477 = vmatmul.f32.gmra.mxu0 %v1450
    %v1478 = vpop.f32.mrf.mxu0
    %v1479 = vadd.f32 %v1438, %v1478
    %1480 = vdwg.mxu0
    %v1481 = vld [vmem:[#allocation5 + $0x440] sm:$0xff]
    %v1482 = vld [vmem:[#allocation5 + $0x448] sm:$0xff]
    %v1484 = vsel %vm220, %v1372, 0
    %v1487 = vsel %vm220, %v1375, 0
    %v1490 = vsel %vm220, %v1378, 0
    %v1493 = vsel %vm220, %v1381, 0
    %1495 = vmatpush.msra.mxu0 0.0
    %1496 = vmatpush.msra.mxu0 0.0
    %1497 = vmatpush.msra.mxu0 0.0
    %1498 = vmatpush.msra.mxu0 0.0
    %1499 = vmatpush.msra.mxu0 0.0
    %1500 = vmatpush.msra.mxu0 0.0
    %1501 = vmatpush.msra.mxu0 0.0
    %1502 = vmatpush.msra.mxu0 0.0
    %1503 = vmatpush.msra.mxu0 0.0
    %1504 = vmatpush.msra.mxu0 0.0
    %1505 = vmatpush.msra.mxu0 0.0
    %1506 = vmatpush.msra.mxu0 0.0
    %1507 = vmatpush.msra.mxu0 0.0
    %1508 = vmatpush.msra.mxu0 0.0
    %1509 = vmatpush.msra.mxu0 %v1482
    %1510 = vmatpush.msra.mxu0 %v1481
    %1511 = vmatmul.f32.gmra.mxu0 %v1484
    %v1512 = vpop.f32.mrf.mxu0
    %v1513 = vadd.f32 0.0, %v1512
    %1514 = vmatmul.f32.gmra.mxu0 %v1487
    %v1515 = vpop.f32.mrf.mxu0
    %v1516 = vadd.f32 0.0, %v1515
    %1517 = vmatmul.f32.gmra.mxu0 %v1490
    %v1518 = vpop.f32.mrf.mxu0
    %v1519 = vadd.f32 0.0, %v1518
    %1520 = vmatmul.f32.gmra.mxu0 %v1493
    %v1521 = vpop.f32.mrf.mxu0
    %v1522 = vadd.f32 0.0, %v1521
    %1523 = vdwg.mxu0
    %v1524 = vadd.f32 %v1470, %v1513
    %v1525 = vadd.f32 %v1473, %v1516
    %v1526 = vadd.f32 %v1476, %v1519
    %v1527 = vadd.f32 %v1479, %v1522
    %1529 = vset.pattern.permute.xlu0 0
    %1530 = vperm.xlu0 %1529, %v1302
    %v1531 = vpop.permute.xlu0 %1530
    %1534 = vset.pattern.permute.xlu0 0
    %1535 = vperm.xlu0 %1534, %v1303
    %v1536 = vpop.permute.xlu0 %1535
    %1539 = vset.pattern.permute.xlu0 0
    %1540 = vperm.xlu0 %1539, %v1304
    %v1541 = vpop.permute.xlu0 %1540
    %1544 = vset.pattern.permute.xlu0 0
    %1545 = vperm.xlu0 %1544, %v1305
    %v1546 = vpop.permute.xlu0 %1545
    %v1548 = vadd.f32 %v1524, %v1531
    %v1549 = vadd.f32 %v1525, %v1536
    %v1550 = vadd.f32 %v1526, %v1541
    %v1551 = vadd.f32 %v1527, %v1546
    %v1552 = vmul.f32 %v1548, 0.2
    %v1553 = vmul.f32 %v1549, 0.2
    %v1554 = vmul.f32 %v1550, 0.2
    %v1555 = vmul.f32 %v1551, 0.2
    %v1556 = vmax.f32 %v1548, %v1552
    %v1557 = vmax.f32 %v1549, %v1553
    %v1558 = vmax.f32 %v1550, %v1554
    %v1559 = vmax.f32 %v1551, %v1555
    %v1560 = vld [vmem:[#allocation5 + $0x460] sm:$0xff]
    %v1561 = vld [vmem:[#allocation5 + $0x468] sm:$0xff]
    %v1562 = vld [vmem:[#allocation5 + $0x470] sm:$0xff]
    %v1563 = vld [vmem:[#allocation5 + $0x478] sm:$0xff]
    %v1565 = vsel %vm52, %v1560, 0
    %v1568 = vsel %vm52, %v1561, 0
    %v1571 = vsel %vm52, %v1562, 0
    %1573 = vmatpush.msra.mxu0 0.0
    %1574 = vmatpush.msra.mxu0 0.0
    %1575 = vmatpush.msra.mxu0 0.0
    %1576 = vmatpush.msra.mxu0 0.0
    %1577 = vmatpush.msra.mxu0 0.0
    %1578 = vmatpush.msra.mxu0 0.0
    %1579 = vmatpush.msra.mxu0 0.0
    %1580 = vmatpush.msra.mxu0 0.0
    %1581 = vmatpush.msra.mxu0 0.0
    %1582 = vmatpush.msra.mxu0 0.0
    %1583 = vmatpush.msra.mxu0 0.0
    %1584 = vmatpush.msra.mxu0 0.0
    %1585 = vmatpush.msra.mxu0 %v1559
    %1586 = vmatpush.msra.mxu0 %v1558
    %1587 = vmatpush.msra.mxu0 %v1557
    %1588 = vmatpush.msra.mxu0 %v1556
    %1589 = vmatmul.f32.gmra.mxu0 %v1565
    %v1590 = vpop.f32.mrf.mxu0
    %v1591 = vadd.f32 0.0, %v1590
    %1592 = vmatmul.f32.gmra.mxu0 %v1568
    %v1593 = vpop.f32.mrf.mxu0
    %v1594 = vadd.f32 0.0, %v1593
    %1595 = vmatmul.f32.gmra.mxu0 %v1571
    %v1596 = vpop.f32.mrf.mxu0
    %v1597 = vadd.f32 0.0, %v1596
    %1598 = vdwg.mxu0
    %v1599 = vld [vmem:[#allocation5 + $0x480] sm:$0xff]
    %v1600 = vld [vmem:[#allocation5 + $0x488] sm:$0xff]
    %v1601 = vld [vmem:[#allocation5 + $0x490] sm:$0xff]
    %v1602 = vld [vmem:[#allocation5 + $0x498] sm:$0xff]
    %v1603 = vld [vmem:[#allocation5 + $0x4c0] sm:$0xff]
    %v1604 = vld [vmem:[#allocation5 + $0x4c8] sm:$0xff]
    %v1605 = vld [vmem:[#allocation5 + $0x4d0] sm:$0xff]
    %v1606 = vld [vmem:[#allocation5 + $0x4d8] sm:$0xff]
    %v1608 = vsel %vm52, %v1597, 0
    %1610 = vmatpush.msra.mxu0 0.0
    %1611 = vmatpush.msra.mxu0 0.0
    %1612 = vmatpush.msra.mxu0 0.0
    %1613 = vmatpush.msra.mxu0 0.0
    %1614 = vmatpush.msra.mxu0 0.0
    %1615 = vmatpush.msra.mxu0 0.0
    %1616 = vmatpush.msra.mxu0 0.0
    %1617 = vmatpush.msra.mxu0 0.0
    %1618 = vmatpush.msra.mxu0 0.0
    %1619 = vmatpush.msra.mxu0 0.0
    %1620 = vmatpush.msra.mxu0 0.0
    %1621 = vmatpush.msra.mxu0 0.0
    %1622 = vmatpush.msra.mxu0 %v1606
    %1623 = vmatpush.msra.mxu0 %v1605
    %1624 = vmatpush.msra.mxu0 %v1604
    %1625 = vmatpush.msra.mxu0 %v1603
    %1626 = vmatmul.f32.gmra.mxu0 %v1608
    %v1627 = vpop.f32.mrf.mxu0
    %v1628 = vadd.f32 0.0, %v1627
    %1629 = vdwg.mxu0
    %v1631 = vsel %vm52, %v1591, 0
    %1633 = vmatpush.msra.mxu0 0.0
    %1634 = vmatpush.msra.mxu0 0.0
    %1635 = vmatpush.msra.mxu0 0.0
    %1636 = vmatpush.msra.mxu0 0.0
    %1637 = vmatpush.msra.mxu0 0.0
    %1638 = vmatpush.msra.mxu0 0.0
    %1639 = vmatpush.msra.mxu0 0.0
    %1640 = vmatpush.msra.mxu0 0.0
    %1641 = vmatpush.msra.mxu0 0.0
    %1642 = vmatpush.msra.mxu0 0.0
    %1643 = vmatpush.msra.mxu0 0.0
    %1644 = vmatpush.msra.mxu0 0.0
    %1645 = vmatpush.msra.mxu0 %v1602
    %1646 = vmatpush.msra.mxu0 %v1601
    %1647 = vmatpush.msra.mxu0 %v1600
    %1648 = vmatpush.msra.mxu0 %v1599
    %1649 = vmatmul.f32.gmra.mxu0 %v1631
    %v1650 = vpop.f32.mrf.mxu0
    %v1651 = vadd.f32 %v1628, %v1650
    %1652 = vdwg.mxu0
    %v1653 = vld [vmem:[#allocation5 + $0x4a0] sm:$0xff]
    %v1654 = vld [vmem:[#allocation5 + $0x4a8] sm:$0xff]
    %v1655 = vld [vmem:[#allocation5 + $0x4b0] sm:$0xff]
    %v1656 = vld [vmem:[#allocation5 + $0x4b8] sm:$0xff]
    %v1658 = vsel %vm52, %v1594, 0
    %1660 = vmatpush.msra.mxu0 0.0
    %1661 = vmatpush.msra.mxu0 0.0
    %1662 = vmatpush.msra.mxu0 0.0
    %1663 = vmatpush.msra.mxu0 0.0
    %1664 = vmatpush.msra.mxu0 0.0
    %1665 = vmatpush.msra.mxu0 0.0
    %1666 = vmatpush.msra.mxu0 0.0
    %1667 = vmatpush.msra.mxu0 0.0
    %1668 = vmatpush.msra.mxu0 0.0
    %1669 = vmatpush.msra.mxu0 0.0
    %1670 = vmatpush.msra.mxu0 0.0
    %1671 = vmatpush.msra.mxu0 0.0
    %1672 = vmatpush.msra.mxu0 %v1656
    %1673 = vmatpush.msra.mxu0 %v1655
    %1674 = vmatpush.msra.mxu0 %v1654
    %1675 = vmatpush.msra.mxu0 %v1653
    %1676 = vmatmul.f32.gmra.mxu0 %v1658
    %v1677 = vpop.f32.mrf.mxu0
    %v1678 = vadd.f32 0.0, %v1677
    %1679 = vdwg.mxu0
    %v1680 = vadd.f32 %v1651, %v1678
    %1682 = vset.pattern.permute.xlu0 0
    %1683 = vperm.xlu0 %1682, %v1563
    %v1684 = vpop.permute.xlu0 %1683
    %v1686 = vadd.f32 %v1680, %v1684
    %v1687 = vsel %vm126, %v1686, -inf
    %1688 = vmax.xlane.f32.xlu0 %v1687
    %v1689 = vpop.xlane.xlu0 %1688
    %v1690 = vsub.f32 %v1686, %v1689
    %v1691 = vmul.f32 %v1690, 1.442695
    %v1692 = vpow.pop %v1691
    %v1693 = vsel %vm126, %v1692, 0.0
    %1694 = vadd.xlane.f32.xlu0 %v1693
    %v1695 = vpop.xlane.xlu0 %1694
    %v1696 = vrcp.pop %v1695
    %v1697 = vmul.f32 %v1695, %v1696
    %v1698 = vsub.f32 1.0, %v1697
    %v1699 = vmul.f32 %v1696, %v1698
    %v1700 = vadd.f32 %v1696, %v1699
    %vm1701 = vweird.f32 %v1695
    %vm1702 = vweird.f32 %v1696
    %vm1703 = vmor %vm1701, %vm1702
    %v1704 = vsel %vm1703, %v1696, %v1700
    %v1705 = vand.u32 2147483647, %v1695
    %vm1706 = vcmp.eq.f32.partialorder %v1705, 8.507059e+37
    %v1707 = vand.u32 %v1695, 2147483648
    %v1708 = vor.u32 1.1754944e-38, %v1707
    %v1709 = vsel %vm1706, %v1708, %v1704
    %v1710 = vmul.f32 %v1692, %v1709
    %1711 = vst.msk [vmem:[#allocation7] sm:$0xff] %vm126, %v1710
    %v1712 = vld [vmem:[#allocation5 + $0x4e0] sm:$0xff]
    %v1713 = vld [vmem:[#allocation5 + $0x4e8] sm:$0xff]
    %v1714 = vld [vmem:[#allocation5 + $0x4f0] sm:$0xff]
    %v1715 = vld [vmem:[#allocation5 + $0x4f8] sm:$0xff]
    %v1716 = vld [vmem:[#allocation5 + $0x500] sm:$0x1]
    %v1717 = vperm.slane %v1716, 0
    %1718 = vmatpush.msra.mxu0 0.0
    %1719 = vmatpush.msra.mxu0 0.0
    %1720 = vmatpush.msra.mxu0 0.0
    %1721 = vmatpush.msra.mxu0 0.0
    %1722 = vmatpush.msra.mxu0 0.0
    %1723 = vmatpush.msra.mxu0 0.0
    %1724 = vmatpush.msra.mxu0 0.0
    %1725 = vmatpush.msra.mxu0 0.0
    %1726 = vmatpush.msra.mxu0 0.0
    %1727 = vmatpush.msra.mxu0 0.0
    %1728 = vmatpush.msra.mxu0 0.0
    %1729 = vmatpush.msra.mxu0 0.0
    %1730 = vmatpush.msra.mxu0 %v1715
    %1731 = vmatpush.msra.mxu0 %v1714
    %1732 = vmatpush.msra.mxu0 %v1713
    %1733 = vmatpush.msra.mxu0 %v1712
    %1734 = vmatmul.f32.gmra.mxu0 %v54
    %v1735 = vpop.f32.mrf.mxu0
    %v1736 = vadd.f32 %v1717, %v1735
    %1737 = vdwg.mxu0
    %v1738 = vmul.f32 %v1736, 0.2
    %v1739 = vmax.f32 %v1736, %v1738
    %v1740 = vld [vmem:[#allocation5 + $0x508] sm:$0xff]
    %v1741 = vld [vmem:[#allocation5 + $0x510] sm:$0xff]
    %v1742 = vld [vmem:[#allocation5 + $0x518] sm:$0x1]
    %v1743 = vperm.slane %v1742, 0
    %v1745 = vsel %vm220, %v1739, 0
    %1747 = vmatpush.msra.mxu0 0.0
    %1748 = vmatpush.msra.mxu0 0.0
    %1749 = vmatpush.msra.mxu0 0.0
    %1750 = vmatpush.msra.mxu0 0.0
    %1751 = vmatpush.msra.mxu0 0.0
    %1752 = vmatpush.msra.mxu0 0.0
    %1753 = vmatpush.msra.mxu0 0.0
    %1754 = vmatpush.msra.mxu0 0.0
    %1755 = vmatpush.msra.mxu0 0.0
    %1756 = vmatpush.msra.mxu0 0.0
    %1757 = vmatpush.msra.mxu0 0.0
    %1758 = vmatpush.msra.mxu0 0.0
    %1759 = vmatpush.msra.mxu0 0.0
    %1760 = vmatpush.msra.mxu0 0.0
    %1761 = vmatpush.msra.mxu0 %v1741
    %1762 = vmatpush.msra.mxu0 %v1740
    %1763 = vmatmul.f32.gmra.mxu0 %v1745
    %v1764 = vpop.f32.mrf.mxu0
    %v1765 = vadd.f32 %v1743, %v1764
    %1766 = vdwg.mxu0
    %v1767 = vmul.f32 %v1765, 0.2
    %v1768 = vmax.f32 %v1765, %v1767
    %v1769 = vld [vmem:[#allocation5 + $0x520] sm:$0xff]
    %v1770 = vld [vmem:[#allocation5 + $0x528] sm:$0xff]
    %v1771 = vld [vmem:[#allocation5 + $0x530] sm:$0xff]
    %v1772 = vld [vmem:[#allocation5 + $0x538] sm:$0xff]
    %v1773 = vld [vmem:[#allocation5 + $0x540] sm:$0x1]
    %v1774 = vperm.slane %v1773, 0
    %v1776 = vsel %vm52, %v1768, 0
    %1778 = vmatpush.msra.mxu0 0.0
    %1779 = vmatpush.msra.mxu0 0.0
    %1780 = vmatpush.msra.mxu0 0.0
    %1781 = vmatpush.msra.mxu0 0.0
    %1782 = vmatpush.msra.mxu0 0.0
    %1783 = vmatpush.msra.mxu0 0.0
    %1784 = vmatpush.msra.mxu0 0.0
    %1785 = vmatpush.msra.mxu0 0.0
    %1786 = vmatpush.msra.mxu0 0.0
    %1787 = vmatpush.msra.mxu0 0.0
    %1788 = vmatpush.msra.mxu0 0.0
    %1789 = vmatpush.msra.mxu0 0.0
    %1790 = vmatpush.msra.mxu0 %v1772
    %1791 = vmatpush.msra.mxu0 %v1771
    %1792 = vmatpush.msra.mxu0 %v1770
    %1793 = vmatpush.msra.mxu0 %v1769
    %1794 = vmatmul.f32.gmra.mxu0 %v1776
    %v1795 = vpop.f32.mrf.mxu0
    %v1796 = vadd.f32 %v1774, %v1795
    %1797 = vdwg.mxu0
    %v1798 = vmul.f32 %v1796, 0.2
    %v1799 = vmax.f32 %v1796, %v1798
    %v1800 = vld [vmem:[#allocation5 + $0x548] sm:$0xff]
    %v1801 = vld [vmem:[#allocation5 + $0x550] sm:$0xff]
    %v1802 = vld [vmem:[#allocation5 + $0x558] sm:$0xff]
    %v1803 = vld [vmem:[#allocation5 + $0x560] sm:$0xff]
    %v1804 = vld [vmem:[#allocation5 + $0x568] sm:$0xff]
    %v1805 = vld [vmem:[#allocation5 + $0x570] sm:$0xff]
    %v1806 = vld [vmem:[#allocation5 + $0x578] sm:$0xff]
    %v1807 = vld [vmem:[#allocation5 + $0x580] sm:$0xff]
    %v1808 = vld [vmem:[#allocation5 + $0x588] sm:$0x1]
    %v1809 = vperm.slane %v1808, 0
    %v1811 = vsel %vm126, %v1799, 0
    %1813 = vmatpush.msra.mxu0 0.0
    %1814 = vmatpush.msra.mxu0 0.0
    %1815 = vmatpush.msra.mxu0 0.0
    %1816 = vmatpush.msra.mxu0 0.0
    %1817 = vmatpush.msra.mxu0 0.0
    %1818 = vmatpush.msra.mxu0 0.0
    %1819 = vmatpush.msra.mxu0 0.0
    %1820 = vmatpush.msra.mxu0 0.0
    %1821 = vmatpush.msra.mxu0 %v1807
    %1822 = vmatpush.msra.mxu0 %v1806
    %1823 = vmatpush.msra.mxu0 %v1805
    %1824 = vmatpush.msra.mxu0 %v1804
    %1825 = vmatpush.msra.mxu0 %v1803
    %1826 = vmatpush.msra.mxu0 %v1802
    %1827 = vmatpush.msra.mxu0 %v1801
    %1828 = vmatpush.msra.mxu0 %v1800
    %1829 = vmatmul.f32.gmra.mxu0 %v1811
    %v1830 = vpop.f32.mrf.mxu0
    %v1831 = vadd.f32 %v1809, %v1830
    %1832 = vdwg.mxu0
    %vm1833 = vcmask 25600
    %v1834 = vsel %vm1833, %v1831, -inf
    %1835 = vmax.xlane.f32.xlu0 %v1834
    %v1836 = vpop.xlane.xlu0 %1835
    %v1837 = vsub.f32 %v1831, %v1836
    %v1838 = vmul.f32 %v1837, 1.442695
    %v1839 = vpow.pop %v1838
    %v1840 = vsel %vm1833, %v1839, 0.0
    %1841 = vadd.xlane.f32.xlu0 %v1840
    %v1842 = vpop.xlane.xlu0 %1841
    %v1843 = vrcp.pop %v1842
    %v1844 = vmul.f32 %v1842, %v1843
    %v1845 = vsub.f32 1.0, %v1844
    %v1846 = vmul.f32 %v1843, %v1845
    %v1847 = vadd.f32 %v1843, %v1846
    %vm1848 = vweird.f32 %v1842
    %vm1849 = vweird.f32 %v1843
    %vm1850 = vmor %vm1848, %vm1849
    %v1851 = vsel %vm1850, %v1843, %v1847
    %v1852 = vand.u32 2147483647, %v1842
    %vm1853 = vcmp.eq.f32.partialorder %v1852, 8.507059e+37
    %v1854 = vand.u32 %v1842, 2147483648
    %v1855 = vor.u32 1.1754944e-38, %v1854
    %v1856 = vsel %vm1853, %v1855, %v1851
    %v1857 = vmul.f32 %v1839, %v1856
    %1858 = vst.msk [vmem:[#allocation8] sm:$0x3] %vm1833, %v1857
    // Predicated region
    $region18: #{conv_generator_forward.1} parent=1 // pred_check
      _
    $region19: #{conv_generator_forward.1} parent=1 // pred_check_branch
      %1860 = sbr.rel (0) target = $region21
    $region20: #{conv_generator_forward.1} parent=1 // pred_region
      %1862 = vsyncadd [#allocation4], 0
      %s1864 = sshll.u32 [#allocation7], 4
      %s1865 = int_to_ptr.vmem [resolvable:$true] %s1864
      %s1866 = sshll.u32 %s2, 4
      %s1867 = int_to_ptr.hbm [resolvable:$true] %s1866
      %1869 = dma.vmem_to_hbm [thread:$0]  %s1865, 128, %s1867, [#allocation4]
    $region21: #{conv_generator_forward.1} parent=1 // pred_fallthru
      _
    // Predicated region
    $region22: #{conv_generator_forward.1} parent=1 // pred_check
      _
    $region23: #{conv_generator_forward.1} parent=1 // pred_check_branch
      %1871 = sbr.rel (0) target = $region25
    $region24: #{conv_generator_forward.1} parent=1 // pred_region
      %1873 = vsyncadd [#allocation9], 0
      %s1875 = sshll.u32 [#allocation8], 4
      %s1876 = int_to_ptr.vmem [resolvable:$true] %s1875
      %s1877 = sshll.u32 %s3, 4
      %s1878 = int_to_ptr.hbm [resolvable:$true] %s1877
      %1880 = dma.vmem_to_hbm [thread:$0]  %s1876, 32, %s1878, [#allocation9]
    $region25: #{conv_generator_forward.1} parent=1 // pred_fallthru
      _
    // Predicated region
    $region26: #{conv_generator_forward.1} parent=1 // pred_check
      _
    $region27: #{conv_generator_forward.1} parent=1 // pred_check_branch
      %1882 = sbr.rel (0) target = $region29
    $region28: #{conv_generator_forward.1} parent=1 // pred_region
      %1884 = dma.done [#allocation4], 128
    $region29: #{conv_generator_forward.1} parent=1 // pred_fallthru
      _
    // Predicated region
    $region30: #{conv_generator_forward.1} parent=1 // pred_check
      _
    $region31: #{conv_generator_forward.1} parent=1 // pred_check_branch
      %1886 = sbr.rel (0) target = $region33
    $region32: #{conv_generator_forward.1} parent=1 // pred_region
      %1888 = dma.done [#allocation9], 32
    $region33: #{conv_generator_forward.1} parent=1 // pred_fallthru
      _
    %1889 = vsyncpa [#allocation3], 1
    %1890 = vsyncpa [#allocation6], 1
    %1891 = vsyncpa [#allocation4], 1
    %1892 = vsyncpa [#allocation9], 1

</llo_original>
